<compile_context>
chip_gen: v6e
topology: v6e:2x2x1
jax: 0.10.0
libtpu: 0.0.40
codegen_flags: <defaults>
</compile_context>

<pallas_src>
import functools

import jax
import jax.numpy as jnp
from jax.experimental import pallas as pl
from jax.experimental.pallas import tpu as pltpu

# ---------------- model config (small, synthetic, lane-dense) ----------------
VOCAB = 128
N_LAYERS = 2
HIDDEN = 128
N_HEADS = 4
N_KV_HEADS = 2
GROUP = N_HEADS // N_KV_HEADS          # 2 query heads per KV head
HEAD_DIM = HIDDEN // N_HEADS           # 32
Q_DIM = N_HEADS * HEAD_DIM             # 128
KV_DIM = N_KV_HEADS * HEAD_DIM         # 64
QKV_DIM = Q_DIM + 2 * KV_DIM           # 256
INTER = 256                            # MLP intermediate size
SEQ = 8
BATCH = 2
ROPE_THETA = 10000.0
RMS_EPS = 1e-5
NEG_INF = -1e30


# ---------------- kernel helpers ----------------
def _rmsnorm(x, w, eps):
    # x: (R, H) f32, w: (1, H) f32
    var = jnp.mean(x * x, axis=-1, keepdims=True)
    return x * jax.lax.rsqrt(var + eps) * w


def _phi3_stack_kernel(h_in_ref, cos_ref, sin_ref, rot_ref,
                       n1_ref, wqkv_ref, wo_ref, n2_ref, wgu_ref, wdn_ref,
                       fnorm_ref, out_ref, bias_scr,
                       *, seq, n_heads, n_kv_heads, head_dim, inter, eps):
    layer = pl.program_id(1)
    group = n_heads // n_kv_heads
    q_dim = n_heads * head_dim
    kv_dim = n_kv_heads * head_dim
    n_all = n_heads + 2 * n_kv_heads           # total 'head slots' in the qkv slab
    bf16 = jnp.bfloat16

    # First layer of this batch block: seed the resident activation (carried in
    # out_ref, whose block index is constant across the layer axis) and build
    # the causal additive bias ONCE into a scratch reused by every layer.
    @pl.when(layer == 0)
    def _():
        out_ref[...] = h_in_ref[...]
        m_idx = jax.lax.broadcasted_iota(jnp.int32, (group * seq, seq), 0)
        k_idx = jax.lax.broadcasted_iota(jnp.int32, (group * seq, seq), 1)
        s_q = m_idx % seq                      # merged (group, S) row -> query position
        bias_scr[...] = jnp.where(k_idx <= s_q, 0.0, NEG_INF).astype(jnp.float32)

    x = out_ref[...]                           # (S, H) f32 residual stream

    # ---------------- attention sub-block ----------------
    xn = _rmsnorm(x, n1_ref[...], eps)
    qkv = jnp.dot(xn.astype(bf16), wqkv_ref[...],
                  preferred_element_type=jnp.float32)            # (S, q+2kv) f32

    # rotate_half RoPE on the whole q|k slab: one MXU matmul against a
    # block-diagonal permutation matrix gives roll(v, hd/2) per head; the
    # cos/sin tables (built in the wrapper) carry the rotate_half sign, the
    # 1/sqrt(hd) attention scale on the q columns, and cos=1 / sin=0 on the v
    # columns so v passes through untouched.  No per-head lane concatenates.
    rot = jnp.dot(qkv.astype(bf16), rot_ref[...],
                  preferred_element_type=jnp.float32)            # (S, q+2kv)
    qkv = qkv * cos_ref[...] + rot * sin_ref[...]

    # Split heads with one reshape + one transpose: (S, n_all*hd) -> (n_all, S, hd).
    heads = jnp.transpose(qkv.reshape(seq, n_all, head_dim), (1, 0, 2))
    # GQA without duplicating K/V: fold the query group into the matmul M dim,
    # so each KV head's K/V tile is shared by its `group` query heads.
    q_g = heads[:n_heads].reshape(n_kv_heads, group * seq, head_dim)   # (nkv, gS, hd)
    k_t = heads[n_heads:n_heads + n_kv_heads]                          # (nkv, S, hd)
    v_t = heads[n_heads + n_kv_heads:]                                 # (nkv, S, hd)

    s = jnp.einsum('nmd,nkd->nmk', q_g.astype(bf16), k_t.astype(bf16),
                   preferred_element_type=jnp.float32)           # (nkv, gS, S)
    s = s + bias_scr[...][None]                                  # causal mask (scratch)
    m = jnp.max(s, axis=-1, keepdims=True)
    p = jnp.exp(s - m)
    l = jnp.sum(p, axis=-1, keepdims=True)
    ctx = jnp.einsum('nmk,nkd->nmd', p.astype(bf16), v_t.astype(bf16),
                     preferred_element_type=jnp.float32)         # (nkv, gS, hd)
    # Normalize after PV: touches S*hd elements instead of S*S scores.
    # (approx=True uses the EUP reciprocal slot; set False for bit-parity.)
    ctx = ctx * pl.reciprocal(l, approx=True)

    # Rebuild a lane-dense (S, q_dim) slab before o_proj (one transpose).
    attn = jnp.transpose(ctx.reshape(n_heads, seq, head_dim),
                         (1, 0, 2)).reshape(seq, q_dim)

    o = jnp.dot(attn.astype(bf16), wo_ref[...],
                preferred_element_type=jnp.float32)              # (S, H)
    h1 = x + o                                                   # residual

    # ---------------- MLP sub-block (fused gate_up, SiLU) ----------------
    x2 = _rmsnorm(h1, n2_ref[...], eps)
    gu = jnp.dot(x2.astype(bf16), wgu_ref[...],
                 preferred_element_type=jnp.float32)             # (S, 2I)
    gate = gu[:, :inter]
    up = gu[:, inter:]
    act = gate * jax.nn.sigmoid(gate) * up                       # SiLU(gate)*up
    dn = jnp.dot(act.astype(bf16), wdn_ref[...],
                 preferred_element_type=jnp.float32)
    h2 = h1 + dn                                                 # residual

    out_ref[...] = h2.astype(out_ref.dtype)                      # carry to next layer

    # Last layer: final RMSNorm in place (single lane-dense output block).
    @pl.when(layer == pl.num_programs(1) - 1)
    def _():
        out_ref[...] = _rmsnorm(h2, fnorm_ref[...], eps).astype(out_ref.dtype)


# ---------------- pallas_call wrapper ----------------
def _phi3_stack_call(h2d, cos_full, sin_full, rope_rot, params):
    R, H = h2d.shape
    L = params["wqkv"].shape[0]
    kern = functools.partial(
        _phi3_stack_kernel,
        seq=SEQ, n_heads=N_HEADS, n_kv_heads=N_KV_HEADS,
        head_dim=HEAD_DIM, inter=INTER, eps=RMS_EPS)
    return pl.pallas_call(
        kern,
        out_shape=jax.ShapeDtypeStruct((R, H), jnp.float32),
        grid=(BATCH, L),                                         # batch parallel, layers serial
        in_specs=[
            pl.BlockSpec((SEQ, H), lambda b, l: (b, 0)),                 # h (read at layer 0)
            pl.BlockSpec((SEQ, QKV_DIM), lambda b, l: (0, 0)),           # cos table (scaled)
            pl.BlockSpec((SEQ, QKV_DIM), lambda b, l: (0, 0)),           # sin table (signed, scaled)
            pl.BlockSpec((QKV_DIM, QKV_DIM), lambda b, l: (0, 0)),       # rotate_half matrix
            pl.BlockSpec((None, 1, H), lambda b, l: (l, 0, 0)),          # n1 (per layer)
            pl.BlockSpec((None, H, QKV_DIM), lambda b, l: (l, 0, 0)),    # wqkv
            pl.BlockSpec((None, Q_DIM, H), lambda b, l: (l, 0, 0)),      # wo
            pl.BlockSpec((None, 1, H), lambda b, l: (l, 0, 0)),          # n2
            pl.BlockSpec((None, H, 2 * INTER), lambda b, l: (l, 0, 0)),  # wgu
            pl.BlockSpec((None, INTER, H), lambda b, l: (l, 0, 0)),      # wdn
            pl.BlockSpec((1, H), lambda b, l: (0, 0)),                   # final norm
        ],
        out_specs=pl.BlockSpec((SEQ, H), lambda b, l: (b, 0)),           # tracks batch block
        scratch_shapes=[pltpu.VMEM((GROUP * SEQ, SEQ), jnp.float32)],    # causal bias
        compiler_params=pltpu.CompilerParams(
            dimension_semantics=("parallel", "arbitrary")),
    )(h2d, cos_full, sin_full, rope_rot,
      params["n1"], params["wqkv"], params["wo"],
      params["n2"], params["wgu"], params["wdn"],
      params["final_norm"])


# ---------------- glue (plain JAX) ----------------
def _rope_tables(seq, head_dim, theta, n_heads, n_kv_heads, scale):
    """cos/sin tables over the full qkv slab: sign of rotate_half folded into sin,
    1/sqrt(hd) folded into the q columns, identity/zero for the v columns."""
    half = head_dim // 2
    inv_freq = 1.0 / (theta ** (jnp.arange(0, head_dim, 2, dtype=jnp.float32) / head_dim))
    t = jnp.arange(seq, dtype=jnp.float32)
    freqs = jnp.outer(t, inv_freq)                                # (S, hd/2)
    emb = jnp.concatenate([freqs, freqs], axis=-1)                # (S, hd)
    cos, sin = jnp.cos(emb), jnp.sin(emb)
    sign = jnp.concatenate([-jnp.ones((half,), jnp.float32),
                            jnp.ones((half,), jnp.float32)])
    sin_s = sin * sign                                            # rotate_half sign
    kv_dim = n_kv_heads * head_dim
    cos_full = jnp.concatenate(
        [jnp.tile(cos * scale, (1, n_heads)),                     # q cols (attn scale folded)
         jnp.tile(cos, (1, n_kv_heads)),                          # k cols
         jnp.ones((seq, kv_dim), jnp.float32)], axis=1)           # v cols: pass-through
    sin_full = jnp.concatenate(
        [jnp.tile(sin_s * scale, (1, n_heads)),
         jnp.tile(sin_s, (1, n_kv_heads)),
         jnp.zeros((seq, kv_dim), jnp.float32)], axis=1)
    return cos_full, sin_full


def _rope_rot_matrix(n_heads, n_kv_heads, head_dim):
    """Block-diagonal permutation so (qkv @ rot) == per-head roll(v, hd/2) on the
    q|k columns (v columns are zero; they are passed through by cos=1/sin=0)."""
    half = head_dim // 2
    idx_in = (jnp.arange(head_dim) + half) % head_dim
    p_head = (jnp.zeros((head_dim, head_dim), jnp.float32)
              .at[idx_in, jnp.arange(head_dim)].set(1.0))
    total = (n_heads + 2 * n_kv_heads) * head_dim
    rot = jnp.zeros((total, total), jnp.float32)
    for h in range(n_heads + n_kv_heads):                         # q heads + k heads
        o = h * head_dim
        rot = rot.at[o:o + head_dim, o:o + head_dim].set(p_head)
    return rot.astype(jnp.bfloat16)


def phi3_forward(params, input_ids):
    B, S = input_ids.shape
    # embedding lookup (data-dependent gather) kept in plain JAX
    h = jnp.take(params["embedding"], input_ids, axis=0)             # (B, S, H) f32
    h2d = h.reshape(B * S, HIDDEN)                                    # rows = b*S + s
    cos_full, sin_full = _rope_tables(S, HEAD_DIM, ROPE_THETA, N_HEADS, N_KV_HEADS,
                                      1.0 / (HEAD_DIM ** 0.5))
    rope_rot = _rope_rot_matrix(N_HEADS, N_KV_HEADS, HEAD_DIM)
    out2d = _phi3_stack_call(h2d, cos_full, sin_full, rope_rot, params)  # one fused kernel
    return out2d.reshape(B, S, HIDDEN)                                # last_hidden_state


# ---------------- deterministic parameter init ----------------
def init_params(key):
    def dense_bf16(k, shape, scale=0.02):
        return (scale * jax.random.normal(k, shape, dtype=jnp.float32)).astype(jnp.bfloat16)

    k_emb, k_qkv, k_o, k_gu, k_dn = jax.random.split(key, 5)
    params = {
        "embedding": (0.02 * jax.random.normal(k_emb, (VOCAB, HIDDEN))).astype(jnp.float32),
        "final_norm": jnp.ones((1, HIDDEN), jnp.float32),
        # per-layer weights stacked on a leading layer axis (layer-indexed BlockSpecs)
        "n1": jnp.ones((N_LAYERS, 1, HIDDEN), jnp.float32),
        "n2": jnp.ones((N_LAYERS, 1, HIDDEN), jnp.float32),
        "wqkv": dense_bf16(k_qkv, (N_LAYERS, HIDDEN, QKV_DIM)),          # fused q|k|v
        "wo": dense_bf16(k_o, (N_LAYERS, Q_DIM, HIDDEN)),
        "wgu": dense_bf16(k_gu, (N_LAYERS, HIDDEN, 2 * INTER)),          # fused gate|up
        "wdn": dense_bf16(k_dn, (N_LAYERS, INTER, HIDDEN)),
    }
    return params


if __name__ == "__main__":
    key = jax.random.PRNGKey(0)
    k_params, k_ids = jax.random.split(key)
    params = init_params(k_params)
    input_ids = jax.random.randint(k_ids, (BATCH, SEQ), 0, VOCAB, dtype=jnp.int32)

    out = jax.jit(phi3_forward)(params, input_ids)
    out = jax.block_until_ready(out)
    assert out.shape == (BATCH, SEQ, HIDDEN) and out.dtype == jnp.float32
    assert bool(jnp.all(jnp.isfinite(out)))
    print("KERNEL_OK")
</pallas_src>

<mosaic_0001>
module attributes {stable_mosaic.version = 11 : i64} {
  func.func @_phi3_stack_kernel(%arg0: i32, %arg1: i32, %arg2: memref<8x128xf32, #tpu.memory_space<vmem>>, %arg3: memref<8x256xf32, #tpu.memory_space<vmem>>, %arg4: memref<8x256xf32, #tpu.memory_space<vmem>>, %arg5: memref<256x256xbf16, #tpu.memory_space<vmem>>, %arg6: memref<1x1x128xf32, #tpu.memory_space<vmem>>, %arg7: memref<1x128x256xbf16, #tpu.memory_space<vmem>>, %arg8: memref<1x128x128xbf16, #tpu.memory_space<vmem>>, %arg9: memref<1x1x128xf32, #tpu.memory_space<vmem>>, %arg10: memref<1x128x512xbf16, #tpu.memory_space<vmem>>, %arg11: memref<1x256x128xbf16, #tpu.memory_space<vmem>>, %arg12: memref<1x128xf32, #tpu.memory_space<vmem>>, %arg13: memref<8x128xf32, #tpu.memory_space<vmem>>, %arg14: memref<16x8xf32, #tpu.memory_space<vmem>>) attributes {dimension_semantics = [#tpu.dimension_semantics<parallel>, #tpu.dimension_semantics<arbitrary>], iteration_bounds = array<i64: 2, 2>, scalar_prefetch = 0 : i64, scratch_operands = 1 : i64, tpu.core_type = #tpu.core_type<tc>, window_params = [{transform_indices = @transform_0, window_bounds = array<i64: 8, 128>}, {pipeline_mode = #tpu.pipeline_mode<synchronous>, transform_indices = @transform_1, window_bounds = array<i64: 8, 256>}, {pipeline_mode = #tpu.pipeline_mode<synchronous>, transform_indices = @transform_2, window_bounds = array<i64: 8, 256>}, {pipeline_mode = #tpu.pipeline_mode<synchronous>, transform_indices = @transform_3, window_bounds = array<i64: 256, 256>}, {transform_indices = @transform_4, window_bounds = array<i64: 1, 1, 128>}, {transform_indices = @transform_5, window_bounds = array<i64: 1, 128, 256>}, {transform_indices = @transform_6, window_bounds = array<i64: 1, 128, 128>}, {transform_indices = @transform_7, window_bounds = array<i64: 1, 1, 128>}, {transform_indices = @transform_8, window_bounds = array<i64: 1, 128, 512>}, {transform_indices = @transform_9, window_bounds = array<i64: 1, 256, 128>}, {pipeline_mode = #tpu.pipeline_mode<synchronous>, transform_indices = @transform_10, window_bounds = array<i64: 1, 128>}, {transform_indices = @transform_11, window_bounds = array<i64: 8, 128>}]} {
    %c0_i32 = arith.constant 0 : i32
    %0 = arith.cmpi eq, %arg1, %c0_i32 : i32
    %1 = arith.extui %0 : i1 to i32
    %c0_i32_0 = arith.constant 0 : i32
    %2 = arith.cmpi ne, %1, %c0_i32_0 : i32
    scf.if %2 {
      %c0_46 = arith.constant 0 : index
      %c0_47 = arith.constant 0 : index
      %100 = vector.load %arg2[%c0_46, %c0_47] : memref<8x128xf32, #tpu.memory_space<vmem>>, vector<8x128xf32>
      %c0_48 = arith.constant 0 : index
      %c0_49 = arith.constant 0 : index
      %101 = vector.load %arg13[%c0_48, %c0_49] : memref<8x128xf32, #tpu.memory_space<vmem>>, vector<8x128xf32>
      tpu.vector_store %arg13[%c0_48, %c0_49], %100 {strides = array<i32>} : memref<8x128xf32, #tpu.memory_space<vmem>>, vector<8x128xf32>,
      %102 = tpu.iota {dimensions = array<i32: 0>} : vector<16x8xi32>
      %103 = tpu.iota {dimensions = array<i32: 1>} : vector<16x8xi32>
      %c8_i32 = arith.constant 8 : i32
      %c0_i32_50 = arith.constant 0 : i32
      %104 = arith.cmpi eq, %c8_i32, %c0_i32_50 : i32
      %c1_i32_51 = arith.constant 1 : i32
      %105 = arith.select %104, %c1_i32_51, %c8_i32 : i32
      %106 = vector.broadcast %105 : i32 to vector<16x8xi32>
      %107 = arith.remsi %102, %106 : vector<16x8xi32>
      %c0_i32_52 = arith.constant 0 : i32
      %108 = vector.broadcast %c0_i32_52 : i32 to vector<16x8xi32>
      %109 = arith.cmpi ne, %107, %108 : vector<16x8xi32>
      %c0_i32_53 = arith.constant 0 : i32
      %110 = vector.broadcast %c0_i32_53 : i32 to vector<16x8xi32>
      %111 = arith.cmpi slt, %107, %110 : vector<16x8xi32>
      %c0_i32_54 = arith.constant 0 : i32
      %112 = arith.cmpi slt, %105, %c0_i32_54 : i32
      %113 = vector.broadcast %112 : i1 to vector<16x8xi1>
      %114 = vector.broadcast %113 : vector<16x8xi1> to vector<16x8xi1>
      %115 = arith.xori %111, %114 : vector<16x8xi1>
      %116 = arith.andi %115, %109 : vector<16x8xi1>
      %117 = vector.broadcast %105 : i32 to vector<16x8xi32>
      %118 = arith.addi %107, %117 : vector<16x8xi32>
      %119 = arith.select %116, %118, %107 : vector<16x8xi1>, vector<16x8xi32>
      %120 = arith.cmpi sle, %103, %119 : vector<16x8xi32>
      %cst_55 = arith.constant 0.000000e+00 : f32
      %cst_56 = arith.constant -1.000000e+30 : f32
      %121 = vector.broadcast %cst_55 : f32 to vector<16x8xf32>
      %122 = vector.broadcast %cst_56 : f32 to vector<16x8xf32>
      %123 = arith.select %120, %121, %122 : vector<16x8xi1>, vector<16x8xf32>
      %c0_57 = arith.constant 0 : index
      %c0_58 = arith.constant 0 : index
      %124 = vector.load %arg14[%c0_57, %c0_58] : memref<16x8xf32, #tpu.memory_space<vmem>>, vector<16x8xf32>
      tpu.vector_store %arg14[%c0_57, %c0_58], %123 {strides = array<i32>} : memref<16x8xf32, #tpu.memory_space<vmem>>, vector<16x8xf32>,
    } else {
    }
    %c0 = arith.constant 0 : index
    %c0_1 = arith.constant 0 : index
    %3 = vector.load %arg13[%c0, %c0_1] : memref<8x128xf32, #tpu.memory_space<vmem>>, vector<8x128xf32>
    %c0_2 = arith.constant 0 : index
    %c0_3 = arith.constant 0 : index
    %c0_4 = arith.constant 0 : index
    %4 = vector.load %arg6[%c0_2, %c0_3, %c0_4] : memref<1x1x128xf32, #tpu.memory_space<vmem>>, vector<1x1x128xf32>
    %5 = vector.shape_cast %4 : vector<1x1x128xf32> to vector<1x128xf32>
    %6 = arith.mulf %3, %3 : vector<8x128xf32>
    %cst = arith.constant dense<0.000000e+00> : vector<8xf32>
    %7 = vector.multi_reduction <add>, %6, %cst [1] : vector<8x128xf32> to vector<8xf32>
    %8 = vector.shape_cast %7 : vector<8xf32> to vector<8x1xf32>
    %cst_5 = arith.constant 1.280000e+02 : f32
    %9 = vector.broadcast %cst_5 : f32 to vector<8x1xf32>
    %10 = arith.divf %8, %9 : vector<8x1xf32>
    %cst_6 = arith.constant 9.99999974E-6 : f32
    %11 = vector.broadcast %cst_6 : f32 to vector<8x1xf32>
    %12 = arith.addf %10, %11 : vector<8x1xf32>
    %13 = math.rsqrt %12 : vector<8x1xf32>
    %14 = vector.broadcast %13 : vector<8x1xf32> to vector<8x128xf32>
    %15 = arith.mulf %3, %14 : vector<8x128xf32>
    %16 = vector.broadcast %5 : vector<1x128xf32> to vector<8x128xf32>
    %17 = arith.mulf %15, %16 : vector<8x128xf32>
    %18 = arith.truncf %17 : vector<8x128xf32> to vector<8x128xbf16>
    %c0_7 = arith.constant 0 : index
    %c0_8 = arith.constant 0 : index
    %c0_9 = arith.constant 0 : index
    %19 = vector.load %arg7[%c0_7, %c0_8, %c0_9] : memref<1x128x256xbf16, #tpu.memory_space<vmem>>, vector<1x128x256xbf16>
    %20 = vector.shape_cast %19 : vector<1x128x256xbf16> to vector<128x256xbf16>
    %cst_10 = arith.constant dense<0.000000e+00> : vector<8x256xf32>
    %21 = tpu.matmul %18, %20, %cst_10 {dimension_numbers = #tpu.dot_dimension_numbers<[1], [0], [0], [1], [0, 0, 1, 1], [], []>} : vector<8x128xbf16>, vector<128x256xbf16>, vector<8x256xf32> -> vector<8x256xf32>
    %22 = arith.truncf %21 : vector<8x256xf32> to vector<8x256xbf16>
    %c0_11 = arith.constant 0 : index
    %c0_12 = arith.constant 0 : index
    %23 = vector.load %arg5[%c0_11, %c0_12] : memref<256x256xbf16, #tpu.memory_space<vmem>>, vector<256x256xbf16>
    %cst_13 = arith.constant dense<0.000000e+00> : vector<8x256xf32>
    %24 = tpu.matmul %22, %23, %cst_13 {dimension_numbers = #tpu.dot_dimension_numbers<[1], [0], [0], [1], [0, 0, 1, 1], [], []>} : vector<8x256xbf16>, vector<256x256xbf16>, vector<8x256xf32> -> vector<8x256xf32>
    %c0_14 = arith.constant 0 : index
    %c0_15 = arith.constant 0 : index
    %25 = vector.load %arg3[%c0_14, %c0_15] : memref<8x256xf32, #tpu.memory_space<vmem>>, vector<8x256xf32>
    %26 = arith.mulf %21, %25 : vector<8x256xf32>
    %c0_16 = arith.constant 0 : index
    %c0_17 = arith.constant 0 : index
    %27 = vector.load %arg4[%c0_16, %c0_17] : memref<8x256xf32, #tpu.memory_space<vmem>>, vector<8x256xf32>
    %28 = arith.mulf %24, %27 : vector<8x256xf32>
    %29 = arith.addf %26, %28 : vector<8x256xf32>
    %30 = vector.shape_cast %29 : vector<8x256xf32> to vector<8x8x32xf32>
    %31 = tpu.transpose %30, [1, 0, 2] : vector<8x8x32xf32> -> vector<8x8x32xf32>
    %32 = vector.extract_strided_slice %31 {offsets = [0, 0, 0], sizes = [4, 8, 32], strides = [1, 1, 1]} : vector<8x8x32xf32> to vector<4x8x32xf32>
    %33 = vector.shape_cast %32 : vector<4x8x32xf32> to vector<2x16x32xf32>
    %34 = vector.extract_strided_slice %31 {offsets = [4, 0, 0], sizes = [2, 8, 32], strides = [1, 1, 1]} : vector<8x8x32xf32> to vector<2x8x32xf32>
    %35 = vector.extract_strided_slice %31 {offsets = [6, 0, 0], sizes = [2, 8, 32], strides = [1, 1, 1]} : vector<8x8x32xf32> to vector<2x8x32xf32>
    %36 = arith.truncf %33 : vector<2x16x32xf32> to vector<2x16x32xbf16>
    %37 = arith.truncf %34 : vector<2x8x32xf32> to vector<2x8x32xbf16>
    "tpu.trace_start"() <{level = 10 : i32, message = "nmd,nkd->nmk"}> : () -> ()
    %cst_18 = arith.constant dense<0.000000e+00> : vector<2x16x8xf32>
    %38 = tpu.matmul %36, %37, %cst_18 {dimension_numbers = #tpu.dot_dimension_numbers<[2], [2], [1], [1], [0, 0, 0, 1, 1, 1], [0], [0]>} : vector<2x16x32xbf16>, vector<2x8x32xbf16>, vector<2x16x8xf32> -> vector<2x16x8xf32>
    "tpu.trace_stop"() : () -> ()
    %c0_19 = arith.constant 0 : index
    %c0_20 = arith.constant 0 : index
    %39 = vector.load %arg14[%c0_19, %c0_20] : memref<16x8xf32, #tpu.memory_space<vmem>>, vector<16x8xf32>
    %40 = vector.shape_cast %39 : vector<16x8xf32> to vector<1x16x8xf32>
    %41 = vector.broadcast %40 : vector<1x16x8xf32> to vector<2x16x8xf32>
    %42 = arith.addf %38, %41 : vector<2x16x8xf32>
    %cst_21 = arith.constant dense<0xFF800000> : vector<2x16xf32>
    %43 = vector.multi_reduction <maximumf>, %42, %cst_21 [2] : vector<2x16x8xf32> to vector<2x16xf32>
    %44 = vector.shape_cast %43 : vector<2x16xf32> to vector<2x16x1xf32>
    %45 = vector.broadcast %44 : vector<2x16x1xf32> to vector<2x16x8xf32>
    %46 = arith.subf %42, %45 : vector<2x16x8xf32>
    %47 = math.exp %46 : vector<2x16x8xf32>
    %cst_22 = arith.constant dense<0.000000e+00> : vector<2x16xf32>
    %48 = vector.multi_reduction <add>, %47, %cst_22 [2] : vector<2x16x8xf32> to vector<2x16xf32>
    %49 = vector.shape_cast %48 : vector<2x16xf32> to vector<2x16x1xf32>
    %50 = arith.truncf %47 : vector<2x16x8xf32> to vector<2x16x8xbf16>
    %51 = arith.truncf %35 : vector<2x8x32xf32> to vector<2x8x32xbf16>
    "tpu.trace_start"() <{level = 10 : i32, message = "nmk,nkd->nmd"}> : () -> ()
    %cst_23 = arith.constant dense<0.000000e+00> : vector<2x16x32xf32>
    %52 = tpu.matmul %50, %51, %cst_23 {dimension_numbers = #tpu.dot_dimension_numbers<[2], [1], [1], [2], [0, 0, 0, 1, 1, 2], [0], [0]>} : vector<2x16x8xbf16>, vector<2x8x32xbf16>, vector<2x16x32xf32> -> vector<2x16x32xf32>
    "tpu.trace_stop"() : () -> ()
    %53 = tpu.reciprocal %49 {approx = true} : vector<2x16x1xf32> -> vector<2x16x1xf32>
    %54 = vector.broadcast %53 : vector<2x16x1xf32> to vector<2x16x32xf32>
    %55 = arith.mulf %52, %54 : vector<2x16x32xf32>
    %56 = vector.shape_cast %55 : vector<2x16x32xf32> to vector<4x8x32xf32>
    %57 = tpu.transpose %56, [1, 0, 2] : vector<4x8x32xf32> -> vector<8x4x32xf32>
    %58 = vector.shape_cast %57 : vector<8x4x32xf32> to vector<8x128xf32>
    %59 = arith.truncf %58 : vector<8x128xf32> to vector<8x128xbf16>
    %c0_24 = arith.constant 0 : index
    %c0_25 = arith.constant 0 : index
    %c0_26 = arith.constant 0 : index
    %60 = vector.load %arg8[%c0_24, %c0_25, %c0_26] : memref<1x128x128xbf16, #tpu.memory_space<vmem>>, vector<1x128x128xbf16>
    %61 = vector.shape_cast %60 : vector<1x128x128xbf16> to vector<128x128xbf16>
    %cst_27 = arith.constant dense<0.000000e+00> : vector<8x128xf32>
    %62 = tpu.matmul %59, %61, %cst_27 {dimension_numbers = #tpu.dot_dimension_numbers<[1], [0], [0], [1], [0, 0, 1, 1], [], []>} : vector<8x128xbf16>, vector<128x128xbf16>, vector<8x128xf32> -> vector<8x128xf32>
    %63 = arith.addf %3, %62 : vector<8x128xf32>
    %c0_28 = arith.constant 0 : index
    %c0_29 = arith.constant 0 : index
    %c0_30 = arith.constant 0 : index
    %64 = vector.load %arg9[%c0_28, %c0_29, %c0_30] : memref<1x1x128xf32, #tpu.memory_space<vmem>>, vector<1x1x128xf32>
    %65 = vector.shape_cast %64 : vector<1x1x128xf32> to vector<1x128xf32>
    %66 = arith.mulf %63, %63 : vector<8x128xf32>
    %cst_31 = arith.constant dense<0.000000e+00> : vector<8xf32>
    %67 = vector.multi_reduction <add>, %66, %cst_31 [1] : vector<8x128xf32> to vector<8xf32>
    %68 = vector.shape_cast %67 : vector<8xf32> to vector<8x1xf32>
    %cst_32 = arith.constant 1.280000e+02 : f32
    %69 = vector.broadcast %cst_32 : f32 to vector<8x1xf32>
    %70 = arith.divf %68, %69 : vector<8x1xf32>
    %cst_33 = arith.constant 9.99999974E-6 : f32
    %71 = vector.broadcast %cst_33 : f32 to vector<8x1xf32>
    %72 = arith.addf %70, %71 : vector<8x1xf32>
    %73 = math.rsqrt %72 : vector<8x1xf32>
    %74 = vector.broadcast %73 : vector<8x1xf32> to vector<8x128xf32>
    %75 = arith.mulf %63, %74 : vector<8x128xf32>
    %76 = vector.broadcast %65 : vector<1x128xf32> to vector<8x128xf32>
    %77 = arith.mulf %75, %76 : vector<8x128xf32>
    %78 = arith.truncf %77 : vector<8x128xf32> to vector<8x128xbf16>
    %c0_34 = arith.constant 0 : index
    %c0_35 = arith.constant 0 : index
    %c0_36 = arith.constant 0 : index
    %79 = vector.load %arg10[%c0_34, %c0_35, %c0_36] : memref<1x128x512xbf16, #tpu.memory_space<vmem>>, vector<1x128x512xbf16>
    %80 = vector.shape_cast %79 : vector<1x128x512xbf16> to vector<128x512xbf16>
    %cst_37 = arith.constant dense<0.000000e+00> : vector<8x512xf32>
    %81 = tpu.matmul %78, %80, %cst_37 {dimension_numbers = #tpu.dot_dimension_numbers<[1], [0], [0], [1], [0, 0, 1, 1], [], []>} : vector<8x128xbf16>, vector<128x512xbf16>, vector<8x512xf32> -> vector<8x512xf32>
    %82 = vector.extract_strided_slice %81 {offsets = [0, 0], sizes = [8, 256], strides = [1, 1]} : vector<8x512xf32> to vector<8x256xf32>
    %83 = vector.extract_strided_slice %81 {offsets = [0, 256], sizes = [8, 256], strides = [1, 1]} : vector<8x512xf32> to vector<8x256xf32>
    %84 = arith.negf %82 : vector<8x256xf32>
    %85 = math.exp %84 : vector<8x256xf32>
    %cst_38 = arith.constant 1.000000e+00 : f32
    %86 = vector.broadcast %cst_38 : f32 to vector<8x256xf32>
    %87 = arith.addf %86, %85 : vector<8x256xf32>
    %88 = arith.divf %86, %87 : vector<8x256xf32>
    %89 = arith.mulf %82, %88 : vector<8x256xf32>
    %90 = arith.mulf %89, %83 : vector<8x256xf32>
    %91 = arith.truncf %90 : vector<8x256xf32> to vector<8x256xbf16>
    %c0_39 = arith.constant 0 : index
    %c0_40 = arith.constant 0 : index
    %c0_41 = arith.constant 0 : index
    %92 = vector.load %arg11[%c0_39, %c0_40, %c0_41] : memref<1x256x128xbf16, #tpu.memory_space<vmem>>, vector<1x256x128xbf16>
    %93 = vector.shape_cast %92 : vector<1x256x128xbf16> to vector<256x128xbf16>
    %cst_42 = arith.constant dense<0.000000e+00> : vector<8x128xf32>
    %94 = tpu.matmul %91, %93, %cst_42 {dimension_numbers = #tpu.dot_dimension_numbers<[1], [0], [0], [1], [0, 0, 1, 1], [], []>} : vector<8x256xbf16>, vector<256x128xbf16>, vector<8x128xf32> -> vector<8x128xf32>
    %95 = arith.addf %63, %94 : vector<8x128xf32>
    %c0_43 = arith.constant 0 : index
    %c0_44 = arith.constant 0 : index
    %96 = vector.load %arg13[%c0_43, %c0_44] : memref<8x128xf32, #tpu.memory_space<vmem>>, vector<8x128xf32>
    tpu.vector_store %arg13[%c0_43, %c0_44], %95 {strides = array<i32>} : memref<8x128xf32, #tpu.memory_space<vmem>>, vector<8x128xf32>,
    %c1_i32 = arith.constant 1 : i32
    %97 = arith.cmpi eq, %arg1, %c1_i32 : i32
    %98 = arith.extui %97 : i1 to i32
    %c0_i32_45 = arith.constant 0 : i32
    %99 = arith.cmpi ne, %98, %c0_i32_45 : i32
    scf.if %99 {
      %c0_46 = arith.constant 0 : index
      %c0_47 = arith.constant 0 : index
      %100 = vector.load %arg12[%c0_46, %c0_47] : memref<1x128xf32, #tpu.memory_space<vmem>>, vector<1x128xf32>
      %101 = arith.mulf %95, %95 : vector<8x128xf32>
      %cst_48 = arith.constant dense<0.000000e+00> : vector<8xf32>
      %102 = vector.multi_reduction <add>, %101, %cst_48 [1] : vector<8x128xf32> to vector<8xf32>
      %103 = vector.shape_cast %102 : vector<8xf32> to vector<8x1xf32>
      %cst_49 = arith.constant 1.280000e+02 : f32
      %104 = vector.broadcast %cst_49 : f32 to vector<8x1xf32>
      %105 = arith.divf %103, %104 : vector<8x1xf32>
      %cst_50 = arith.constant 9.99999974E-6 : f32
      %106 = vector.broadcast %cst_50 : f32 to vector<8x1xf32>
      %107 = arith.addf %105, %106 : vector<8x1xf32>
      %108 = math.rsqrt %107 : vector<8x1xf32>
      %109 = vector.broadcast %108 : vector<8x1xf32> to vector<8x128xf32>
      %110 = arith.mulf %95, %109 : vector<8x128xf32>
      %111 = vector.broadcast %100 : vector<1x128xf32> to vector<8x128xf32>
      %112 = arith.mulf %110, %111 : vector<8x128xf32>
      %c0_51 = arith.constant 0 : index
      %c0_52 = arith.constant 0 : index
      %113 = vector.load %arg13[%c0_51, %c0_52] : memref<8x128xf32, #tpu.memory_space<vmem>>, vector<8x128xf32>
      tpu.vector_store %arg13[%c0_51, %c0_52], %112 {strides = array<i32>} : memref<8x128xf32, #tpu.memory_space<vmem>>, vector<8x128xf32>,
    } else {
    }
    return
  }
  func.func @transform_0(%arg0: i32, %arg1: i32) -> (i32, i32) {
    %c0_i32 = arith.constant 0 : i32
    %c0_i32_0 = arith.constant 0 : i32
    return %arg0, %c0_i32 : i32, i32
  }
  func.func @transform_1(%arg0: i32, %arg1: i32) -> (i32, i32) {
    %c0_i32 = arith.constant 0 : i32
    %c0_i32_0 = arith.constant 0 : i32
    %c0_i32_1 = arith.constant 0 : i32
    return %c0_i32, %c0_i32_0 : i32, i32
  }
  func.func @transform_2(%arg0: i32, %arg1: i32) -> (i32, i32) {
    %c0_i32 = arith.constant 0 : i32
    %c0_i32_0 = arith.constant 0 : i32
    %c0_i32_1 = arith.constant 0 : i32
    return %c0_i32, %c0_i32_0 : i32, i32
  }
  func.func @transform_3(%arg0: i32, %arg1: i32) -> (i32, i32) {
    %c0_i32 = arith.constant 0 : i32
    %c0_i32_0 = arith.constant 0 : i32
    %c0_i32_1 = arith.constant 0 : i32
    return %c0_i32, %c0_i32_0 : i32, i32
  }
  func.func @transform_4(%arg0: i32, %arg1: i32) -> (i32, i32, i32) {
    %c0_i32 = arith.constant 0 : i32
    %c0_i32_0 = arith.constant 0 : i32
    %c0_i32_1 = arith.constant 0 : i32
    return %arg1, %c0_i32, %c0_i32_0 : i32, i32, i32
  }
  func.func @transform_5(%arg0: i32, %arg1: i32) -> (i32, i32, i32) {
    %c0_i32 = arith.constant 0 : i32
    %c0_i32_0 = arith.constant 0 : i32
    %c0_i32_1 = arith.constant 0 : i32
    return %arg1, %c0_i32, %c0_i32_0 : i32, i32, i32
  }
  func.func @transform_6(%arg0: i32, %arg1: i32) -> (i32, i32, i32) {
    %c0_i32 = arith.constant 0 : i32
    %c0_i32_0 = arith.constant 0 : i32
    %c0_i32_1 = arith.constant 0 : i32
    return %arg1, %c0_i32, %c0_i32_0 : i32, i32, i32
  }
  func.func @transform_7(%arg0: i32, %arg1: i32) -> (i32, i32, i32) {
    %c0_i32 = arith.constant 0 : i32
    %c0_i32_0 = arith.constant 0 : i32
    %c0_i32_1 = arith.constant 0 : i32
    return %arg1, %c0_i32, %c0_i32_0 : i32, i32, i32
  }
  func.func @transform_8(%arg0: i32, %arg1: i32) -> (i32, i32, i32) {
    %c0_i32 = arith.constant 0 : i32
    %c0_i32_0 = arith.constant 0 : i32
    %c0_i32_1 = arith.constant 0 : i32
    return %arg1, %c0_i32, %c0_i32_0 : i32, i32, i32
  }
  func.func @transform_9(%arg0: i32, %arg1: i32) -> (i32, i32, i32) {
    %c0_i32 = arith.constant 0 : i32
    %c0_i32_0 = arith.constant 0 : i32
    %c0_i32_1 = arith.constant 0 : i32
    return %arg1, %c0_i32, %c0_i32_0 : i32, i32, i32
  }
  func.func @transform_10(%arg0: i32, %arg1: i32) -> (i32, i32) {
    %c0_i32 = arith.constant 0 : i32
    %c0_i32_0 = arith.constant 0 : i32
    %c0_i32_1 = arith.constant 0 : i32
    return %c0_i32, %c0_i32_0 : i32, i32
  }
  func.func @transform_11(%arg0: i32, %arg1: i32) -> (i32, i32) {
    %c0_i32 = arith.constant 0 : i32
    %c0_i32_0 = arith.constant 0 : i32
    return %arg0, %c0_i32 : i32, i32
  }
}

</mosaic_0001>

<llo_original>
// kernel: tile.24
$region0: #{tile.24}
  %s0 = inlined_call_operand.vmem [shape: f32[8,4,32], index: 0, kind: input, shape index: {}]
  %s1 = inlined_call_operand.vmem [shape: f32[8,128], index: 1, kind: output, shape index: {}]
  $region1: #{tile.24} parent=0
    #allocation0 [shape = 'u8[32768]{0}', space=vmem, size = 0x8000, scoped, tag = 'scoped mem for input reshape']
    %s3 = sshll.u32 1, 4
    %s4 = ssub.s32 %s3, 1
    %s5 = smul.addr 4, 7
    %s6 = scalar_lea.vmem %s0, %s5
    %v7 = vld [vmem:[%s6] sm:%s4]
    %s8 = scalar_lea.vmem [#allocation0], 56
    %9 = vst [vmem:[%s8] sm:%s4] %v7
    %s10 = smul.addr 4, 6
    %s11 = scalar_lea.vmem %s0, %s10
    %v12 = vld [vmem:[%s11] sm:%s4]
    %s13 = scalar_lea.vmem [#allocation0], 48
    %14 = vst [vmem:[%s13] sm:%s4] %v12
    %s15 = smul.addr 4, 5
    %s16 = scalar_lea.vmem %s0, %s15
    %v17 = vld [vmem:[%s16] sm:%s4]
    %s18 = scalar_lea.vmem [#allocation0], 40
    %19 = vst [vmem:[%s18] sm:%s4] %v17
    %s20 = smul.addr 4, 4
    %s21 = scalar_lea.vmem %s0, %s20
    %v22 = vld [vmem:[%s21] sm:%s4]
    %s23 = scalar_lea.vmem [#allocation0], 32
    %24 = vst [vmem:[%s23] sm:%s4] %v22
    %s25 = smul.addr 4, 3
    %s26 = scalar_lea.vmem %s0, %s25
    %v27 = vld [vmem:[%s26] sm:%s4]
    %s28 = scalar_lea.vmem [#allocation0], 24
    %29 = vst [vmem:[%s28] sm:%s4] %v27
    %s30 = smul.addr 4, 2
    %s31 = scalar_lea.vmem %s0, %s30
    %v32 = vld [vmem:[%s31] sm:%s4]
    %s33 = scalar_lea.vmem [#allocation0], 16
    %34 = vst [vmem:[%s33] sm:%s4] %v32
    %s35 = scalar_lea.vmem %s0, 4
    %v36 = vld [vmem:[%s35] sm:%s4]
    %s37 = scalar_lea.vmem [#allocation0], 8
    %38 = vst [vmem:[%s37] sm:%s4] %v36
    %v39 = vld [vmem:[%s0] sm:%s4]
    %40 = vst [vmem:[#allocation0] sm:%s4] %v39
    %v41 = vld [vmem:[#allocation0] ss:$8 sm:$0xf]
    %v42 = vld [vmem:[#allocation0] ss:$8 sm:$0xf0]
    %vm43 = vcmask 1047556
    %v44 = vsel %vm43, %v42, %v41
    %vm45 = vcmask 261120
    %46 = vst.msk [vmem:[%s1] sm:$0xff] %vm45, %v44
    %s47 = scalar_lea.vmem [#allocation0], 3
    %v48 = vld [vmem:[%s47] ss:$8 sm:$0xf]
    %s49 = scalar_lea.vmem [#allocation0], 3
    %v50 = vld [vmem:[%s49] ss:$8 sm:$0xf0]
    %vm51 = vcmask 1047556
    %v52 = vsel %vm51, %v50, %v48
    %53 = vrot.lane.b32.xlu0 %v52, 96
    %v54 = vpop.permute.xlu0 %53
    %vm55 = vcmask 1048320
    %56 = vst.msk [vmem:[%s1] sm:$0xff] %vm55, %v54
    %s57 = scalar_lea.vmem [#allocation0], 2
    %v58 = vld [vmem:[%s57] ss:$8 sm:$0xf]
    %s59 = scalar_lea.vmem [#allocation0], 2
    %v60 = vld [vmem:[%s59] ss:$8 sm:$0xf0]
    %vm61 = vcmask 1047556
    %v62 = vsel %vm61, %v60, %v58
    %63 = vrot.lane.b32.xlu0 %v62, 64
    %v64 = vpop.permute.xlu0 %63
    %vm65 = vcmask 785920
    %66 = vst.msk [vmem:[%s1] sm:$0xff] %vm65, %v64
    %s67 = scalar_lea.vmem [#allocation0], 1
    %v68 = vld [vmem:[%s67] ss:$8 sm:$0xf]
    %s69 = scalar_lea.vmem [#allocation0], 1
    %v70 = vld [vmem:[%s69] ss:$8 sm:$0xf0]
    %vm71 = vcmask 1047556
    %v72 = vsel %vm71, %v70, %v68
    %73 = vrot.lane.b32.xlu0 %v72, 32
    %v74 = vpop.permute.xlu0 %73
    %vm75 = vcmask 523520
    %76 = vst.msk [vmem:[%s1] sm:$0xff] %vm75, %v74

// kernel: tile.29
$region0: #{tile.29}
  %s0 = inlined_call_operand.vmem [shape: f32[8,2,32], index: 0, kind: input, shape index: {}]
  %s1 = inlined_call_operand.vmem [shape: f32[8,64], index: 1, kind: output, shape index: {}]
  $region1: #{tile.29} parent=0
    #allocation0 [shape = 'u8[32768]{0}', space=vmem, size = 0x8000, scoped, tag = 'scoped mem for input reshape']
    %s3 = sshll.u32 1, 2
    %s4 = ssub.s32 %s3, 1
    %s5 = smul.addr 2, 7
    %s6 = scalar_lea.vmem %s0, %s5
    %v7 = vld [vmem:[%s6] sm:%s4]
    %s8 = scalar_lea.vmem [#allocation0], 56
    %9 = vst [vmem:[%s8] sm:%s4] %v7
    %s10 = smul.addr 2, 6
    %s11 = scalar_lea.vmem %s0, %s10
    %v12 = vld [vmem:[%s11] sm:%s4]
    %s13 = scalar_lea.vmem [#allocation0], 48
    %14 = vst [vmem:[%s13] sm:%s4] %v12
    %s15 = smul.addr 2, 5
    %s16 = scalar_lea.vmem %s0, %s15
    %v17 = vld [vmem:[%s16] sm:%s4]
    %s18 = scalar_lea.vmem [#allocation0], 40
    %19 = vst [vmem:[%s18] sm:%s4] %v17
    %s20 = smul.addr 2, 4
    %s21 = scalar_lea.vmem %s0, %s20
    %v22 = vld [vmem:[%s21] sm:%s4]
    %s23 = scalar_lea.vmem [#allocation0], 32
    %24 = vst [vmem:[%s23] sm:%s4] %v22
    %s25 = smul.addr 2, 3
    %s26 = scalar_lea.vmem %s0, %s25
    %v27 = vld [vmem:[%s26] sm:%s4]
    %s28 = scalar_lea.vmem [#allocation0], 24
    %29 = vst [vmem:[%s28] sm:%s4] %v27
    %s30 = smul.addr 2, 2
    %s31 = scalar_lea.vmem %s0, %s30
    %v32 = vld [vmem:[%s31] sm:%s4]
    %s33 = scalar_lea.vmem [#allocation0], 16
    %34 = vst [vmem:[%s33] sm:%s4] %v32
    %s35 = scalar_lea.vmem %s0, 2
    %v36 = vld [vmem:[%s35] sm:%s4]
    %s37 = scalar_lea.vmem [#allocation0], 8
    %38 = vst [vmem:[%s37] sm:%s4] %v36
    %v39 = vld [vmem:[%s0] sm:%s4]
    %40 = vst [vmem:[#allocation0] sm:%s4] %v39
    %v41 = vld [vmem:[#allocation0] ss:$8 sm:$0xf]
    %v42 = vld [vmem:[#allocation0] ss:$8 sm:$0xf0]
    %vm43 = vcmask 1047556
    %v44 = vsel %vm43, %v42, %v41
    %vm45 = vcmask 261120
    %46 = vst.msk [vmem:[%s1] sm:$0xff] %vm45, %v44
    %s47 = scalar_lea.vmem [#allocation0], 1
    %v48 = vld [vmem:[%s47] ss:$8 sm:$0xf]
    %s49 = scalar_lea.vmem [#allocation0], 1
    %v50 = vld [vmem:[%s49] ss:$8 sm:$0xf0]
    %vm51 = vcmask 1047556
    %v52 = vsel %vm51, %v50, %v48
    %53 = vrot.lane.b32.xlu0 %v52, 32
    %v54 = vpop.permute.xlu0 %53
    %vm55 = vcmask 523520
    %56 = vst.msk [vmem:[%s1] sm:$0xff] %vm55, %v54

// kernel: phi3_forward.1
$region0: #{phi3_forward.1}
  #allocation0 [shape = 'u32[]', space=smem, size = 0x4, offset = 0x4, fixed_abs, tag = 'smem constant byte address 0x4 - core index']
  #allocation1 [shape = 'u32[144,128]{1,0:T(1,128)}', space=vmem, size = 0x12000, scoped, tag = 'internal scratch']
  #allocation2 [shape = 'f32[16,8]{1,0:T(8,128)}', space=vmem, size = 0x2000, scoped, tag = 'scratch operand']
  %s0 = inlined_call_operand.vmem [shape: f32[16,128], index: 0, kind: input, shape index: {}]
  %s1 = inlined_call_operand.vmem [shape: f32[8,256], index: 1, kind: input, shape index: {}]
  %s2 = inlined_call_operand.vmem [shape: f32[8,256], index: 2, kind: input, shape index: {}]
  %s3 = inlined_call_operand.vmem [shape: bf16[256,256], index: 3, kind: input, shape index: {}]
  %s4 = inlined_call_operand.vmem [shape: f32[2,1,128], index: 4, kind: input, shape index: {}]
  %s5 = inlined_call_operand.vmem [shape: bf16[2,128,256], index: 5, kind: input, shape index: {}]
  %s6 = inlined_call_operand.vmem [shape: bf16[2,128,128], index: 6, kind: input, shape index: {}]
  %s7 = inlined_call_operand.vmem [shape: f32[2,1,128], index: 7, kind: input, shape index: {}]
  %s8 = inlined_call_operand.vmem [shape: bf16[2,128,512], index: 8, kind: input, shape index: {}]
  %s9 = inlined_call_operand.vmem [shape: bf16[2,256,128], index: 9, kind: input, shape index: {}]
  %s10 = inlined_call_operand.vmem [shape: f32[1,128], index: 10, kind: input, shape index: {}]
  %s11 = inlined_call_operand.hbm [shape: f32[16,128], index: 11, kind: output, shape index: {}]
  %s12 = sld [smem:[#allocation0]]
  $region85: #{phi3_forward.1} parent=0
    _
  %s14 = ssub.s32 1, %s12
  %s15 = scalar_select 0, %s14, %s12
  $region1: #{phi3_forward.1} parent=0
    #allocation3 [shape = 'u8[8192]{0}', space=vmem, size = 0x2000, scoped, tag = 'output window, operand 0']
    #allocation4 [shape = 's32[2]{0}', space=sflag, size = 0x8, scoped, tag = 'scoped memory for phi3_forward.1']
    %16 = vsyncpa [#allocation4], 0
    %s17 = scalar_lea.sflag [#allocation4], 1
    %18 = vsyncpa %s17, 0
    loop: start=0, step=1, limit=6
    $region2: #{phi3_forward.1} parent=1 // loop_pre_header
      _
    $region3: #{phi3_forward.1} parent=1 // loop_header
      %s20 = sphi 0, %s24
      %p21 = scmp.ge.s32.totalorder %s20, 6
      %s27 = sphi 0, %s39
      %s28 = sphi 0, %s35
      %s29 = sphi 0, %s27
      %s30 = sphi 0, %s28
      %s31 = sphi 0, %s29
      %s32 = sphi 0, %s30
      %s42 = sphi 0, %s44
      %s45 = sphi 0, %s42
      %s46 = sphi 0, %s45
      %s62 = sphi 0, %s46
      %s66 = sphi 0, %s66
      %s68 = sphi 0, %s66
      %s69 = sphi 0, %s68
      %s83 = sphi 0, %s69
      %s87 = sphi 0, %s87
      %s89 = sphi 0, %s87
      %s90 = sphi 0, %s89
      %s104 = sphi 0, %s90
      %s108 = sphi 0, %s108
      %s110 = sphi 0, %s108
      %s111 = sphi 0, %s110
      %s125 = sphi 0, %s111
      %s131 = sphi 0, %s133
      %s134 = sphi 0, %s131
      %s135 = sphi 0, %s134
      %s151 = sphi 0, %s135
      %s157 = sphi 0, %s159
      %s160 = sphi 0, %s157
      %s161 = sphi 0, %s160
      %s177 = sphi 0, %s161
      %s183 = sphi 0, %s185
      %s186 = sphi 0, %s183
      %s187 = sphi 0, %s186
      %s203 = sphi 0, %s187
      %s209 = sphi 0, %s211
      %s212 = sphi 0, %s209
      %s213 = sphi 0, %s212
      %s229 = sphi 0, %s213
      %s235 = sphi 0, %s237
      %s238 = sphi 0, %s235
      %s239 = sphi 0, %s238
      %s255 = sphi 0, %s239
      %s261 = sphi 0, %s263
      %s264 = sphi 0, %s261
      %s265 = sphi 0, %s264
      %s281 = sphi 0, %s265
      %s285 = sphi 0, %s285
      %s287 = sphi 0, %s285
      %s288 = sphi 0, %s287
      %s302 = sphi 0, %s288
      %s308 = sphi 0, %s310
      %s311 = sphi 0, %s308
      %s312 = sphi 0, %s311
      %s328 = sphi 0, %s312
    $region4: #{phi3_forward.1} parent=1 // loop_header_branch
      %23 = sbr.rel (%p21) target = $region8
    $region5: #{phi3_forward.1} parent=1 // loop_body
      %s25 = ssub.s32 %s20, 1
      %s26 = ssub.s32 %s20, 2
      %s33 = sadd.s32 1, %s28
      %p34 = scmp.ge.s32.totalorder %s33, 2
      %s35 = scalar_select %p34, 0, %s33
      %s36 = sadd.s32 1, %s27
      %s37 = scalar_select %p34, %s36, %s27
      %p38 = scmp.ge.s32.totalorder %s37, 2
      %s39 = scalar_select %p38, 0, %s37
      %s40 = ssub.s32 %s27, %s39
      %p41 = scmp.eq.s32.totalorder %s40, 0
      %s43 = sadd.s32 %s42, 1
      %s44 = scalar_select %p41, %s42, %s43
      %p47 = pneg %p41
      %p48 = scmp.eq.s32.totalorder %s20, 3
      %p49 = por %p47, %p48
      %p50 = scmp.ne.s32.totalorder %s42, %s45
      %p51 = scmp.eq.s32.totalorder %s20, 0
      %p52 = por %p50, %p51
      %p53 = scmp.ne.s32.totalorder %s42, %s45
      %p54 = scmp.eq.s32.totalorder %s25, 3
      %p55 = por %p53, %p54
      %p56 = scmp.ne.s32.totalorder %s45, %s46
      %p57 = scmp.eq.s32.totalorder %s25, 0
      %p58 = por %p56, %p57
      %p59 = scmp.ne.s32.totalorder %s45, %s46
      %p60 = scmp.eq.s32.totalorder %s26, 3
      %p61 = por %p59, %p60
      %p63 = scmp.ne.s32.totalorder %s46, %s62
      %p64 = scmp.eq.s32.totalorder %s26, 0
      %p65 = por %p63, %p64
      %s67 = sadd.s32 %s66, 1
      %p70 = scmp.eq.s32.totalorder %s20, 3
      %p71 = scmp.ne.s32.totalorder %s66, %s68
      %p72 = scmp.eq.s32.totalorder %s20, 0
      %p73 = por %p71, %p72
      %p74 = scmp.ne.s32.totalorder %s66, %s68
      %p75 = scmp.eq.s32.totalorder %s25, 3
      %p76 = por %p74, %p75
      %p77 = scmp.ne.s32.totalorder %s68, %s69
      %p78 = scmp.eq.s32.totalorder %s25, 0
      %p79 = por %p77, %p78
      %p80 = scmp.ne.s32.totalorder %s68, %s69
      %p81 = scmp.eq.s32.totalorder %s26, 3
      %p82 = por %p80, %p81
      %p84 = scmp.ne.s32.totalorder %s69, %s83
      %p85 = scmp.eq.s32.totalorder %s26, 0
      %p86 = por %p84, %p85
      %s88 = sadd.s32 %s87, 1
      %p91 = scmp.eq.s32.totalorder %s20, 3
      %p92 = scmp.ne.s32.totalorder %s87, %s89
      %p93 = scmp.eq.s32.totalorder %s20, 0
      %p94 = por %p92, %p93
      %p95 = scmp.ne.s32.totalorder %s87, %s89
      %p96 = scmp.eq.s32.totalorder %s25, 3
      %p97 = por %p95, %p96
      %p98 = scmp.ne.s32.totalorder %s89, %s90
      %p99 = scmp.eq.s32.totalorder %s25, 0
      %p100 = por %p98, %p99
      %p101 = scmp.ne.s32.totalorder %s89, %s90
      %p102 = scmp.eq.s32.totalorder %s26, 3
      %p103 = por %p101, %p102
      %p105 = scmp.ne.s32.totalorder %s90, %s104
      %p106 = scmp.eq.s32.totalorder %s26, 0
      %p107 = por %p105, %p106
      %s109 = sadd.s32 %s108, 1
      %p112 = scmp.eq.s32.totalorder %s20, 3
      %p113 = scmp.ne.s32.totalorder %s108, %s110
      %p114 = scmp.eq.s32.totalorder %s20, 0
      %p115 = por %p113, %p114
      %p116 = scmp.ne.s32.totalorder %s108, %s110
      %p117 = scmp.eq.s32.totalorder %s25, 3
      %p118 = por %p116, %p117
      %p119 = scmp.ne.s32.totalorder %s110, %s111
      %p120 = scmp.eq.s32.totalorder %s25, 0
      %p121 = por %p119, %p120
      %p122 = scmp.ne.s32.totalorder %s110, %s111
      %p123 = scmp.eq.s32.totalorder %s26, 3
      %p124 = por %p122, %p123
      %p126 = scmp.ne.s32.totalorder %s111, %s125
      %p127 = scmp.eq.s32.totalorder %s26, 0
      %p128 = por %p126, %p127
      %s129 = ssub.s32 %s28, %s35
      %p130 = scmp.eq.s32.totalorder %s129, 0
      %s132 = sadd.s32 %s131, 1
      %s133 = scalar_select %p130, %s131, %s132
      %p136 = pneg %p130
      %p137 = scmp.eq.s32.totalorder %s20, 3
      %p138 = por %p136, %p137
      %p139 = scmp.ne.s32.totalorder %s131, %s134
      %p140 = scmp.eq.s32.totalorder %s20, 0
      %p141 = por %p139, %p140
      %p142 = scmp.ne.s32.totalorder %s131, %s134
      %p143 = scmp.eq.s32.totalorder %s25, 3
      %p144 = por %p142, %p143
      %p145 = scmp.ne.s32.totalorder %s134, %s135
      %p146 = scmp.eq.s32.totalorder %s25, 0
      %p147 = por %p145, %p146
      %p148 = scmp.ne.s32.totalorder %s134, %s135
      %p149 = scmp.eq.s32.totalorder %s26, 3
      %p150 = por %p148, %p149
      %p152 = scmp.ne.s32.totalorder %s135, %s151
      %p153 = scmp.eq.s32.totalorder %s26, 0
      %p154 = por %p152, %p153
      %s155 = ssub.s32 %s28, %s35
      %p156 = scmp.eq.s32.totalorder %s155, 0
      %s158 = sadd.s32 %s157, 1
      %s159 = scalar_select %p156, %s157, %s158
      %p162 = pneg %p156
      %p163 = scmp.eq.s32.totalorder %s20, 3
      %p164 = por %p162, %p163
      %p165 = scmp.ne.s32.totalorder %s157, %s160
      %p166 = scmp.eq.s32.totalorder %s20, 0
      %p167 = por %p165, %p166
      %p168 = scmp.ne.s32.totalorder %s157, %s160
      %p169 = scmp.eq.s32.totalorder %s25, 3
      %p170 = por %p168, %p169
      %p171 = scmp.ne.s32.totalorder %s160, %s161
      %p172 = scmp.eq.s32.totalorder %s25, 0
      %p173 = por %p171, %p172
      %p174 = scmp.ne.s32.totalorder %s160, %s161
      %p175 = scmp.eq.s32.totalorder %s26, 3
      %p176 = por %p174, %p175
      %p178 = scmp.ne.s32.totalorder %s161, %s177
      %p179 = scmp.eq.s32.totalorder %s26, 0
      %p180 = por %p178, %p179
      %s181 = ssub.s32 %s28, %s35
      %p182 = scmp.eq.s32.totalorder %s181, 0
      %s184 = sadd.s32 %s183, 1
      %s185 = scalar_select %p182, %s183, %s184
      %p188 = pneg %p182
      %p189 = scmp.eq.s32.totalorder %s20, 3
      %p190 = por %p188, %p189
      %p191 = scmp.ne.s32.totalorder %s183, %s186
      %p192 = scmp.eq.s32.totalorder %s20, 0
      %p193 = por %p191, %p192
      %p194 = scmp.ne.s32.totalorder %s183, %s186
      %p195 = scmp.eq.s32.totalorder %s25, 3
      %p196 = por %p194, %p195
      %p197 = scmp.ne.s32.totalorder %s186, %s187
      %p198 = scmp.eq.s32.totalorder %s25, 0
      %p199 = por %p197, %p198
      %p200 = scmp.ne.s32.totalorder %s186, %s187
      %p201 = scmp.eq.s32.totalorder %s26, 3
      %p202 = por %p200, %p201
      %p204 = scmp.ne.s32.totalorder %s187, %s203
      %p205 = scmp.eq.s32.totalorder %s26, 0
      %p206 = por %p204, %p205
      %s207 = ssub.s32 %s28, %s35
      %p208 = scmp.eq.s32.totalorder %s207, 0
      %s210 = sadd.s32 %s209, 1
      %s211 = scalar_select %p208, %s209, %s210
      %p214 = pneg %p208
      %p215 = scmp.eq.s32.totalorder %s20, 3
      %p216 = por %p214, %p215
      %p217 = scmp.ne.s32.totalorder %s209, %s212
      %p218 = scmp.eq.s32.totalorder %s20, 0
      %p219 = por %p217, %p218
      %p220 = scmp.ne.s32.totalorder %s209, %s212
      %p221 = scmp.eq.s32.totalorder %s25, 3
      %p222 = por %p220, %p221
      %p223 = scmp.ne.s32.totalorder %s212, %s213
      %p224 = scmp.eq.s32.totalorder %s25, 0
      %p225 = por %p223, %p224
      %p226 = scmp.ne.s32.totalorder %s212, %s213
      %p227 = scmp.eq.s32.totalorder %s26, 3
      %p228 = por %p226, %p227
      %p230 = scmp.ne.s32.totalorder %s213, %s229
      %p231 = scmp.eq.s32.totalorder %s26, 0
      %p232 = por %p230, %p231
      %s233 = ssub.s32 %s28, %s35
      %p234 = scmp.eq.s32.totalorder %s233, 0
      %s236 = sadd.s32 %s235, 1
      %s237 = scalar_select %p234, %s235, %s236
      %p240 = pneg %p234
      %p241 = scmp.eq.s32.totalorder %s20, 3
      %p242 = por %p240, %p241
      %p243 = scmp.ne.s32.totalorder %s235, %s238
      %p244 = scmp.eq.s32.totalorder %s20, 0
      %p245 = por %p243, %p244
      %p246 = scmp.ne.s32.totalorder %s235, %s238
      %p247 = scmp.eq.s32.totalorder %s25, 3
      %p248 = por %p246, %p247
      %p249 = scmp.ne.s32.totalorder %s238, %s239
      %p250 = scmp.eq.s32.totalorder %s25, 0
      %p251 = por %p249, %p250
      %p252 = scmp.ne.s32.totalorder %s238, %s239
      %p253 = scmp.eq.s32.totalorder %s26, 3
      %p254 = por %p252, %p253
      %p256 = scmp.ne.s32.totalorder %s239, %s255
      %p257 = scmp.eq.s32.totalorder %s26, 0
      %p258 = por %p256, %p257
      %s259 = ssub.s32 %s28, %s35
      %p260 = scmp.eq.s32.totalorder %s259, 0
      %s262 = sadd.s32 %s261, 1
      %s263 = scalar_select %p260, %s261, %s262
      %p266 = pneg %p260
      %p267 = scmp.eq.s32.totalorder %s20, 3
      %p268 = por %p266, %p267
      %p269 = scmp.ne.s32.totalorder %s261, %s264
      %p270 = scmp.eq.s32.totalorder %s20, 0
      %p271 = por %p269, %p270
      %p272 = scmp.ne.s32.totalorder %s261, %s264
      %p273 = scmp.eq.s32.totalorder %s25, 3
      %p274 = por %p272, %p273
      %p275 = scmp.ne.s32.totalorder %s264, %s265
      %p276 = scmp.eq.s32.totalorder %s25, 0
      %p277 = por %p275, %p276
      %p278 = scmp.ne.s32.totalorder %s264, %s265
      %p279 = scmp.eq.s32.totalorder %s26, 3
      %p280 = por %p278, %p279
      %p282 = scmp.ne.s32.totalorder %s265, %s281
      %p283 = scmp.eq.s32.totalorder %s26, 0
      %p284 = por %p282, %p283
      %s286 = sadd.s32 %s285, 1
      %p289 = scmp.eq.s32.totalorder %s20, 3
      %p290 = scmp.ne.s32.totalorder %s285, %s287
      %p291 = scmp.eq.s32.totalorder %s20, 0
      %p292 = por %p290, %p291
      %p293 = scmp.ne.s32.totalorder %s285, %s287
      %p294 = scmp.eq.s32.totalorder %s25, 3
      %p295 = por %p293, %p294
      %p296 = scmp.ne.s32.totalorder %s287, %s288
      %p297 = scmp.eq.s32.totalorder %s25, 0
      %p298 = por %p296, %p297
      %p299 = scmp.ne.s32.totalorder %s287, %s288
      %p300 = scmp.eq.s32.totalorder %s26, 3
      %p301 = por %p299, %p300
      %p303 = scmp.ne.s32.totalorder %s288, %s302
      %p304 = scmp.eq.s32.totalorder %s26, 0
      %p305 = por %p303, %p304
      %s306 = ssub.s32 %s27, %s39
      %p307 = scmp.eq.s32.totalorder %s306, 0
      %s309 = sadd.s32 %s308, 1
      %s310 = scalar_select %p307, %s308, %s309
      %p313 = pneg %p307
      %p314 = scmp.eq.s32.totalorder %s20, 3
      %p315 = por %p313, %p314
      %p316 = scmp.ne.s32.totalorder %s308, %s311
      %p317 = scmp.eq.s32.totalorder %s20, 0
      %p318 = por %p316, %p317
      %p319 = scmp.ne.s32.totalorder %s308, %s311
      %p320 = scmp.eq.s32.totalorder %s25, 3
      %p321 = por %p319, %p320
      %p322 = scmp.ne.s32.totalorder %s311, %s312
      %p323 = scmp.eq.s32.totalorder %s25, 0
      %p324 = por %p322, %p323
      %p325 = scmp.ne.s32.totalorder %s311, %s312
      %p326 = scmp.eq.s32.totalorder %s26, 3
      %p327 = por %p325, %p326
      %p329 = scmp.ne.s32.totalorder %s312, %s328
      %p330 = scmp.eq.s32.totalorder %s26, 0
      %p331 = por %p329, %p330
      %p332 = scmp.le.s32.totalorder 1, %s20
      %p333 = scmp.lt.s32.totalorder %s20, 5
      %p334 = pnand %p332, %p333
      %p335 = pneg %p334
      // Predicated region
      $region9: #{phi3_forward.1} parent=5 // pred_check
        _
      $region10: #{phi3_forward.1} parent=5 // pred_check_branch
        %337 = sbr.rel (%p334) target = $region12
      $region11: #{phi3_forward.1} parent=5 // pred_region
        %s338 = ssub.s32 %s20, 1
        // Predicated region
        $region13: #{phi3_forward.1} parent=11 // pred_check
          %p339 = pneg %p79
        $region14: #{phi3_forward.1} parent=11 // pred_check_branch
          %341 = sbr.rel (%p339) target = $region16
        $region15: #{phi3_forward.1} parent=11 // pred_region
          _
        $region16: #{phi3_forward.1} parent=11 // pred_fallthru
          _
        // Predicated region
        $region17: #{phi3_forward.1} parent=11 // pred_check
          %p342 = pneg %p100
        $region18: #{phi3_forward.1} parent=11 // pred_check_branch
          %344 = sbr.rel (%p342) target = $region20
        $region19: #{phi3_forward.1} parent=11 // pred_region
          _
        $region20: #{phi3_forward.1} parent=11 // pred_fallthru
          _
        // Predicated region
        $region21: #{phi3_forward.1} parent=11 // pred_check
          %p345 = pneg %p121
        $region22: #{phi3_forward.1} parent=11 // pred_check_branch
          %347 = sbr.rel (%p345) target = $region24
        $region23: #{phi3_forward.1} parent=11 // pred_region
          _
        $region24: #{phi3_forward.1} parent=11 // pred_fallthru
          _
        // Predicated region
        $region25: #{phi3_forward.1} parent=11 // pred_check
          %p348 = pneg %p298
        $region26: #{phi3_forward.1} parent=11 // pred_check_branch
          %350 = sbr.rel (%p348) target = $region28
        $region27: #{phi3_forward.1} parent=11 // pred_region
          _
        $region28: #{phi3_forward.1} parent=11 // pred_fallthru
          _
      $region12: #{phi3_forward.1} parent=5 // pred_fallthru
        _
      %p351 = scmp.lt.s32.totalorder %s20, 4
      // Predicated region
      $region29: #{phi3_forward.1} parent=5 // pred_check
        %p352 = pneg %p351
      $region30: #{phi3_forward.1} parent=5 // pred_check_branch
        %354 = sbr.rel (%p352) target = $region32
      $region31: #{phi3_forward.1} parent=5 // pred_region
        // Predicated region
        $region33: #{phi3_forward.1} parent=31 // pred_check
          %p355 = pneg %p52
        $region34: #{phi3_forward.1} parent=31 // pred_check_branch
          %357 = sbr.rel (%p355) target = $region36
        $region35: #{phi3_forward.1} parent=31 // pred_region
          %p358 = scmp.lt.s32.totalorder %s27, 1
          %s359 = scalar_select %p358, %s27, 1
          %s360 = smul.addr %s359, 8
          %s361 = scalar_lea.vmem %s0, %s360
        $region36: #{phi3_forward.1} parent=31 // pred_fallthru
          _
        // Predicated region
        $region37: #{phi3_forward.1} parent=31 // pred_check
          %p362 = pneg %p141
        $region38: #{phi3_forward.1} parent=31 // pred_check_branch
          %364 = sbr.rel (%p362) target = $region40
        $region39: #{phi3_forward.1} parent=31 // pred_region
          %p365 = scmp.lt.s32.totalorder %s28, 1
          %s366 = scalar_select %p365, %s28, 1
          %s367 = scalar_lea.vmem %s4, %s366
        $region40: #{phi3_forward.1} parent=31 // pred_fallthru
          _
        // Predicated region
        $region41: #{phi3_forward.1} parent=31 // pred_check
          %p368 = pneg %p167
        $region42: #{phi3_forward.1} parent=31 // pred_check_branch
          %370 = sbr.rel (%p368) target = $region44
        $region43: #{phi3_forward.1} parent=31 // pred_region
          %p371 = scmp.lt.s32.totalorder %s28, 1
          %s372 = scalar_select %p371, %s28, 1
          %s373 = smul.addr %s372, 32
          %s374 = smul.addr %s373, 4
          %s375 = scalar_lea.vmem %s5, %s374
        $region44: #{phi3_forward.1} parent=31 // pred_fallthru
          _
        // Predicated region
        $region45: #{phi3_forward.1} parent=31 // pred_check
          %p376 = pneg %p193
        $region46: #{phi3_forward.1} parent=31 // pred_check_branch
          %378 = sbr.rel (%p376) target = $region48
        $region47: #{phi3_forward.1} parent=31 // pred_region
          %p379 = scmp.lt.s32.totalorder %s28, 1
          %s380 = scalar_select %p379, %s28, 1
          %s381 = smul.addr %s380, 16
          %s382 = smul.addr %s381, 4
          %s383 = scalar_lea.vmem %s6, %s382
        $region48: #{phi3_forward.1} parent=31 // pred_fallthru
          _
        // Predicated region
        $region49: #{phi3_forward.1} parent=31 // pred_check
          %p384 = pneg %p219
        $region50: #{phi3_forward.1} parent=31 // pred_check_branch
          %386 = sbr.rel (%p384) target = $region52
        $region51: #{phi3_forward.1} parent=31 // pred_region
          %p387 = scmp.lt.s32.totalorder %s28, 1
          %s388 = scalar_select %p387, %s28, 1
          %s389 = scalar_lea.vmem %s7, %s388
        $region52: #{phi3_forward.1} parent=31 // pred_fallthru
          _
        // Predicated region
        $region53: #{phi3_forward.1} parent=31 // pred_check
          %p390 = pneg %p245
        $region54: #{phi3_forward.1} parent=31 // pred_check_branch
          %392 = sbr.rel (%p390) target = $region56
        $region55: #{phi3_forward.1} parent=31 // pred_region
          %p393 = scmp.lt.s32.totalorder %s28, 1
          %s394 = scalar_select %p393, %s28, 1
          %s395 = smul.addr %s394, 64
          %s396 = smul.addr %s395, 4
          %s397 = scalar_lea.vmem %s8, %s396
        $region56: #{phi3_forward.1} parent=31 // pred_fallthru
          _
        // Predicated region
        $region57: #{phi3_forward.1} parent=31 // pred_check
          %p398 = pneg %p271
        $region58: #{phi3_forward.1} parent=31 // pred_check_branch
          %400 = sbr.rel (%p398) target = $region60
        $region59: #{phi3_forward.1} parent=31 // pred_region
          %p401 = scmp.lt.s32.totalorder %s28, 1
          %s402 = scalar_select %p401, %s28, 1
          %s403 = smul.addr %s402, 32
          %s404 = smul.addr %s403, 4
          %s405 = scalar_lea.vmem %s9, %s404
        $region60: #{phi3_forward.1} parent=31 // pred_fallthru
          _
      $region32: #{phi3_forward.1} parent=5 // pred_fallthru
        _
      %p406 = scmp.le.s32.totalorder 1, %s20
      %p407 = scmp.lt.s32.totalorder %s20, 5
      %p408 = pnand %p406, %p407
      %p409 = pneg %p408
      // Predicated region
      $region61: #{phi3_forward.1} parent=5 // pred_check
        _
      $region62: #{phi3_forward.1} parent=5 // pred_check_branch
        %411 = sbr.rel (%p408) target = $region64
      $region63: #{phi3_forward.1} parent=5 // pred_region
        %s412 = ssub.s32 %s20, 1
        %p413 = scmp.lt.s32.totalorder %s29, 1
        %s414 = scalar_select %p413, %s29, 1
        %s415 = smul.addr %s414, 8
        %s416 = scalar_lea.vmem %s0, %s415
        %p417 = pneg %p58
        %p418 = pneg %p55
        %p419 = pneg %p79
        %p420 = pneg %p76
        %p421 = pneg %p100
        %p422 = pneg %p97
        %p423 = pneg %p121
        %p424 = pneg %p118
        %p425 = scmp.lt.s32.totalorder %s30, 1
        %s426 = scalar_select %p425, %s30, 1
        %s427 = scalar_lea.vmem %s4, %s426
        %p428 = pneg %p147
        %p429 = pneg %p144
        %p430 = scmp.lt.s32.totalorder %s30, 1
        %s431 = scalar_select %p430, %s30, 1
        %s432 = smul.addr %s431, 32
        %s433 = smul.addr %s432, 4
        %s434 = scalar_lea.vmem %s5, %s433
        %p435 = pneg %p173
        %p436 = pneg %p170
        %p437 = scmp.lt.s32.totalorder %s30, 1
        %s438 = scalar_select %p437, %s30, 1
        %s439 = smul.addr %s438, 16
        %s440 = smul.addr %s439, 4
        %s441 = scalar_lea.vmem %s6, %s440
        %p442 = pneg %p199
        %p443 = pneg %p196
        %p444 = scmp.lt.s32.totalorder %s30, 1
        %s445 = scalar_select %p444, %s30, 1
        %s446 = scalar_lea.vmem %s7, %s445
        %p447 = pneg %p225
        %p448 = pneg %p222
        %p449 = scmp.lt.s32.totalorder %s30, 1
        %s450 = scalar_select %p449, %s30, 1
        %s451 = smul.addr %s450, 64
        %s452 = smul.addr %s451, 4
        %s453 = scalar_lea.vmem %s8, %s452
        %p454 = pneg %p251
        %p455 = pneg %p248
        %p456 = scmp.lt.s32.totalorder %s30, 1
        %s457 = scalar_select %p456, %s30, 1
        %s458 = smul.addr %s457, 32
        %s459 = smul.addr %s458, 4
        %s460 = scalar_lea.vmem %s9, %s459
        %p461 = pneg %p277
        %p462 = pneg %p274
        %p463 = pneg %p298
        %p464 = pneg %p295
        %p465 = pneg %p324
        %p466 = pneg %p321
        %s467 = sand.u32 %s311, 1
        %s468 = scalar_lea.sflag [#allocation4], %s467
        %s469 = sand.u32 %s311, 1
        %s470 = smul.addr %s469, 8
        %s471 = scalar_lea.vmem [#allocation3], %s470
        %p472 = scmp.lt.s32.totalorder %s29, 1
        %s473 = scalar_select %p472, %s29, 1
        %s474 = smul.addr %s473, 8
        %s475 = scalar_lea.vmem %s0, %s474
        %p476 = scmp.lt.s32.totalorder %s30, 1
        %s477 = scalar_select %p476, %s30, 1
        %s478 = scalar_lea.vmem %s4, %s477
        %p479 = scmp.lt.s32.totalorder %s30, 1
        %s480 = scalar_select %p479, %s30, 1
        %s481 = smul.addr %s480, 32
        %s482 = smul.addr %s481, 4
        %s483 = scalar_lea.vmem %s5, %s482
        %p484 = scmp.lt.s32.totalorder %s30, 1
        %s485 = scalar_select %p484, %s30, 1
        %s486 = smul.addr %s485, 16
        %s487 = smul.addr %s486, 4
        %s488 = scalar_lea.vmem %s6, %s487
        %p489 = scmp.lt.s32.totalorder %s30, 1
        %s490 = scalar_select %p489, %s30, 1
        %s491 = scalar_lea.vmem %s7, %s490
        %p492 = scmp.lt.s32.totalorder %s30, 1
        %s493 = scalar_select %p492, %s30, 1
        %s494 = smul.addr %s493, 64
        %s495 = smul.addr %s494, 4
        %s496 = scalar_lea.vmem %s8, %s495
        %p497 = scmp.lt.s32.totalorder %s30, 1
        %s498 = scalar_select %p497, %s30, 1
        %s499 = smul.addr %s498, 32
        %s500 = smul.addr %s499, 4
        %s501 = scalar_lea.vmem %s9, %s500
        %p503 = scmp.eq.s32.totalorder %s30, 0
        // Predicated region
        $region65: #{phi3_forward.1} parent=63 // pred_check
          %p504 = pneg %p503
        $region66: #{phi3_forward.1} parent=63 // pred_check_branch
          %506 = sbr.rel (%p504) target = $region68
        $region67: #{phi3_forward.1} parent=63 // pred_region
          %v507 = vld [vmem:[%s475] sm:$0xff]
          %508 = vst [vmem:[%s471] sm:$0xff] %v507
          %v509 = vlaneseq
          %v510 = vshrl.u32 %v509, 7
          %v511 = vadd.s32 %v510, 8
          %v512 = vlaneseq
          %v513 = vand.u32 %v512, 127
          %vm514 = vcmp.lt.s32.totalorder %v510, 0
          %v515 = vsub.s32 0, %v510
          %v516 = vsel %vm514, %v515, %v510
          %v517 = vshrl.u32 %v516, 3
          %v518 = vand.u32 %v516, 7
          %v519 = vsub.s32 0, %v518
          %v520 = vsel %vm514, %v519, %v518
          %vm521 = vcmp.lt.s32.totalorder %v511, 0
          %v522 = vsub.s32 0, %v511
          %v523 = vsel %vm521, %v522, %v511
          %v524 = vshrl.u32 %v523, 3
          %v525 = vand.u32 %v523, 7
          %v526 = vsub.s32 0, %v525
          %v527 = vsel %vm521, %v526, %v525
          %vm528 = vcmp.ne.s32.totalorder %v520, 0
          %vm529 = vcmp.ne.s32.totalorder %v527, 0
          %vm530 = vcmp.lt.s32.totalorder %v520, 0
          %vm531 = vcmp.lt.s32.totalorder %v527, 0
          %vm532 = vmand %vm530, %vm528
          %vm533 = vmand %vm531, %vm529
          %v534 = vadd.s32 %v520, 8
          %v535 = vadd.s32 %v527, 8
          %v536 = vsel %vm532, %v534, %v520
          %v537 = vsel %vm533, %v535, %v527
          %vm538 = vcmp.le.s32.totalorder %v513, %v536
          %vm539 = vcmp.le.s32.totalorder %v513, %v537
          %v540 = vsel %vm538, 0.0, -1e+30
          %v541 = vsel %vm539, 0.0, -1e+30
          %vm542 = vcmask 64512
          %543 = vst.msk [vmem:[#allocation2] sm:$0xff] %vm542, %v540
          %544 = vst.msk [vmem:[#allocation2 + $0x8] sm:$0xff] %vm542, %v541
        $region68: #{phi3_forward.1} parent=63 // pred_fallthru
          _
        %v545 = vld [vmem:[%s471] sm:$0xff]
        %v546 = vld [vmem:[%s478] sm:$0x1]
        %v547 = vmul.f32 %v545, %v545
        %548 = vadd.xlane.f32.xlu0 %v547
        %v549 = vpop.xlane.xlu0 %548
        %v550 = vrcp.pop 128.0
        %v551 = vmul.f32 %v549, %v550
        %v552 = vadd.f32 %v551, 1e-05
        %v553 = vrsqrt.pop %v552
        %v554 = vmul.f32 %v545, %v553
        %v556 = vlaneseq
        %v557 = vshrl.u32 %v556, 7
        %v558 = vsub.s32 0, %v557
        %v559 = vrot.slane %v546, %v558
        %v561 = vmul.f32 %v554, %v559
        %v562 = vpack.c.bf16 %v561, %v561
        %v563 = vld [vmem:[%s483] sm:$0xff]
        %v564 = vld [vmem:[%s483 + $0x8] sm:$0xff]
        %v565 = vld [vmem:[%s483 + $0x10] sm:$0xff]
        %v566 = vld [vmem:[%s483 + $0x18] sm:$0xff]
        %v567 = vld [vmem:[%s483 + $0x20] sm:$0xff]
        %v568 = vld [vmem:[%s483 + $0x28] sm:$0xff]
        %v569 = vld [vmem:[%s483 + $0x30] sm:$0xff]
        %v570 = vld [vmem:[%s483 + $0x38] sm:$0xff]
        %v571 = vld [vmem:[%s483 + $0x40] sm:$0xff]
        %v572 = vld [vmem:[%s483 + $0x48] sm:$0xff]
        %v573 = vld [vmem:[%s483 + $0x50] sm:$0xff]
        %v574 = vld [vmem:[%s483 + $0x58] sm:$0xff]
        %v575 = vld [vmem:[%s483 + $0x60] sm:$0xff]
        %v576 = vld [vmem:[%s483 + $0x68] sm:$0xff]
        %v577 = vld [vmem:[%s483 + $0x70] sm:$0xff]
        %v578 = vld [vmem:[%s483 + $0x78] sm:$0xff]
        %v595 = vunpack.c.l.b16 %v563
        %v596 = vunpack.c.h.b16 %v563
        %v597 = vunpack.c.l.b16 %v564
        %v598 = vunpack.c.h.b16 %v564
        %v599 = vunpack.c.l.b16 %v565
        %v600 = vunpack.c.h.b16 %v565
        %v601 = vunpack.c.l.b16 %v566
        %v602 = vunpack.c.h.b16 %v566
        %v603 = vunpack.c.l.b16 %v567
        %v604 = vunpack.c.h.b16 %v567
        %v605 = vunpack.c.l.b16 %v568
        %v606 = vunpack.c.h.b16 %v568
        %v607 = vunpack.c.l.b16 %v569
        %v608 = vunpack.c.h.b16 %v569
        %v609 = vunpack.c.l.b16 %v570
        %v610 = vunpack.c.h.b16 %v570
        %v611 = vunpack.c.l.b16 %v571
        %v612 = vunpack.c.h.b16 %v571
        %v613 = vunpack.c.l.b16 %v572
        %v614 = vunpack.c.h.b16 %v572
        %v615 = vunpack.c.l.b16 %v573
        %v616 = vunpack.c.h.b16 %v573
        %v617 = vunpack.c.l.b16 %v574
        %v618 = vunpack.c.h.b16 %v574
        %v619 = vunpack.c.l.b16 %v575
        %v620 = vunpack.c.h.b16 %v575
        %v621 = vunpack.c.l.b16 %v576
        %v622 = vunpack.c.h.b16 %v576
        %v623 = vunpack.c.l.b16 %v577
        %v624 = vunpack.c.h.b16 %v577
        %v625 = vunpack.c.l.b16 %v578
        %v626 = vunpack.c.h.b16 %v578
        %v627 = vpack.c.b16 %v597, %v595
        %v628 = vpack.c.b16 %v598, %v596
        %v629 = vpack.c.b16 %v601, %v599
        %v630 = vpack.c.b16 %v602, %v600
        %v631 = vpack.c.b16 %v605, %v603
        %v632 = vpack.c.b16 %v606, %v604
        %v633 = vpack.c.b16 %v609, %v607
        %v634 = vpack.c.b16 %v610, %v608
        %v635 = vpack.c.b16 %v613, %v611
        %v636 = vpack.c.b16 %v614, %v612
        %v637 = vpack.c.b16 %v617, %v615
        %v638 = vpack.c.b16 %v618, %v616
        %v639 = vpack.c.b16 %v621, %v619
        %v640 = vpack.c.b16 %v622, %v620
        %v641 = vpack.c.b16 %v625, %v623
        %v642 = vpack.c.b16 %v626, %v624
        %659 = vmatprep.subr.bf16.mxu0 %v642
        %660 = vmatpush1.bf16.msra.mxu0 %v641
        %661 = vmatprep.subr.bf16.mxu0 %v640
        %662 = vmatpush1.bf16.msra.mxu0 %v639
        %663 = vmatprep.subr.bf16.mxu0 %v638
        %664 = vmatpush1.bf16.msra.mxu0 %v637
        %665 = vmatprep.subr.bf16.mxu0 %v636
        %666 = vmatpush1.bf16.msra.mxu0 %v635
        %667 = vmatprep.subr.bf16.mxu0 %v634
        %668 = vmatpush1.bf16.msra.mxu0 %v633
        %669 = vmatprep.subr.bf16.mxu0 %v632
        %670 = vmatpush1.bf16.msra.mxu0 %v631
        %671 = vmatprep.subr.bf16.mxu0 %v630
        %672 = vmatpush1.bf16.msra.mxu0 %v629
        %673 = vmatprep.subr.bf16.mxu0 %v628
        %674 = vmatpush1.bf16.msra.mxu0 %v627
        %675 = vmatprep.subr.bf16.mxu0 0
        %676 = vmatpush2.bf16.msra.mxu0 0
        %677 = vmatprep.subr.bf16.mxu0 0
        %678 = vmatpush2.bf16.msra.mxu0 0
        %679 = vmatprep.subr.bf16.mxu0 0
        %680 = vmatpush2.bf16.msra.mxu0 0
        %681 = vmatprep.subr.bf16.mxu0 0
        %682 = vmatpush2.bf16.msra.mxu0 0
        %683 = vmatprep.subr.bf16.mxu0 0
        %684 = vmatpush2.bf16.msra.mxu0 0
        %685 = vmatprep.subr.bf16.mxu0 0
        %686 = vmatpush2.bf16.msra.mxu0 0
        %687 = vmatprep.subr.bf16.mxu0 0
        %688 = vmatpush2.bf16.msra.mxu0 0
        %689 = vmatprep.subr.bf16.mxu0 0
        %690 = vmatpush2.bf16.msra.mxu0 0
        %691 = vmatprep.mubr.bf16.mxu0 0
        %692 = vmatmul.mubr.bf16.gmra.mxu0 %v562
        %v693 = vpop.f32.mrf.mxu0
        %v694 = vadd.f32 0.0, %v693
        %v695 = vpop.f32.mrf.mxu0
        %v696 = vadd.f32 0.0, %v695
        %v697 = vpop.f32.mrf.mxu0
        %v698 = vpop.f32.mrf.mxu0
        %699 = vdwg.mxu0
        %v700 = vpack.c.bf16 %v694, %v694
        %v701 = vpack.c.bf16 %v696, %v696
        %v702 = vld [vmem:[%s3] sm:$0xff]
        %v703 = vld [vmem:[%s3 + $0x8] sm:$0xff]
        %v704 = vld [vmem:[%s3 + $0x10] sm:$0xff]
        %v705 = vld [vmem:[%s3 + $0x18] sm:$0xff]
        %v706 = vld [vmem:[%s3 + $0x20] sm:$0xff]
        %v707 = vld [vmem:[%s3 + $0x28] sm:$0xff]
        %v708 = vld [vmem:[%s3 + $0x30] sm:$0xff]
        %v709 = vld [vmem:[%s3 + $0x38] sm:$0xff]
        %v710 = vld [vmem:[%s3 + $0x40] sm:$0xff]
        %v711 = vld [vmem:[%s3 + $0x48] sm:$0xff]
        %v712 = vld [vmem:[%s3 + $0x50] sm:$0xff]
        %v713 = vld [vmem:[%s3 + $0x58] sm:$0xff]
        %v714 = vld [vmem:[%s3 + $0x60] sm:$0xff]
        %v715 = vld [vmem:[%s3 + $0x68] sm:$0xff]
        %v716 = vld [vmem:[%s3 + $0x70] sm:$0xff]
        %v717 = vld [vmem:[%s3 + $0x78] sm:$0xff]
        %v718 = vld [vmem:[%s3 + $0x80] sm:$0xff]
        %v719 = vld [vmem:[%s3 + $0x88] sm:$0xff]
        %v720 = vld [vmem:[%s3 + $0x90] sm:$0xff]
        %v721 = vld [vmem:[%s3 + $0x98] sm:$0xff]
        %v722 = vld [vmem:[%s3 + $0xa0] sm:$0xff]
        %v723 = vld [vmem:[%s3 + $0xa8] sm:$0xff]
        %v724 = vld [vmem:[%s3 + $0xb0] sm:$0xff]
        %v725 = vld [vmem:[%s3 + $0xb8] sm:$0xff]
        %v726 = vld [vmem:[%s3 + $0xc0] sm:$0xff]
        %v727 = vld [vmem:[%s3 + $0xc8] sm:$0xff]
        %v728 = vld [vmem:[%s3 + $0xd0] sm:$0xff]
        %v729 = vld [vmem:[%s3 + $0xd8] sm:$0xff]
        %v730 = vld [vmem:[%s3 + $0xe0] sm:$0xff]
        %v731 = vld [vmem:[%s3 + $0xe8] sm:$0xff]
        %v732 = vld [vmem:[%s3 + $0xf0] sm:$0xff]
        %v733 = vld [vmem:[%s3 + $0xf8] sm:$0xff]
        %v766 = vunpack.c.l.b16 %v702
        %v767 = vunpack.c.h.b16 %v702
        %v768 = vunpack.c.l.b16 %v703
        %v769 = vunpack.c.h.b16 %v703
        %v770 = vunpack.c.l.b16 %v704
        %v771 = vunpack.c.h.b16 %v704
        %v772 = vunpack.c.l.b16 %v705
        %v773 = vunpack.c.h.b16 %v705
        %v774 = vunpack.c.l.b16 %v706
        %v775 = vunpack.c.h.b16 %v706
        %v776 = vunpack.c.l.b16 %v707
        %v777 = vunpack.c.h.b16 %v707
        %v778 = vunpack.c.l.b16 %v708
        %v779 = vunpack.c.h.b16 %v708
        %v780 = vunpack.c.l.b16 %v709
        %v781 = vunpack.c.h.b16 %v709
        %v782 = vunpack.c.l.b16 %v710
        %v783 = vunpack.c.h.b16 %v710
        %v784 = vunpack.c.l.b16 %v711
        %v785 = vunpack.c.h.b16 %v711
        %v786 = vunpack.c.l.b16 %v712
        %v787 = vunpack.c.h.b16 %v712
        %v788 = vunpack.c.l.b16 %v713
        %v789 = vunpack.c.h.b16 %v713
        %v790 = vunpack.c.l.b16 %v714
        %v791 = vunpack.c.h.b16 %v714
        %v792 = vunpack.c.l.b16 %v715
        %v793 = vunpack.c.h.b16 %v715
        %v794 = vunpack.c.l.b16 %v716
        %v795 = vunpack.c.h.b16 %v716
        %v796 = vunpack.c.l.b16 %v717
        %v797 = vunpack.c.h.b16 %v717
        %v798 = vunpack.c.l.b16 %v718
        %v799 = vunpack.c.h.b16 %v718
        %v800 = vunpack.c.l.b16 %v719
        %v801 = vunpack.c.h.b16 %v719
        %v802 = vunpack.c.l.b16 %v720
        %v803 = vunpack.c.h.b16 %v720
        %v804 = vunpack.c.l.b16 %v721
        %v805 = vunpack.c.h.b16 %v721
        %v806 = vunpack.c.l.b16 %v722
        %v807 = vunpack.c.h.b16 %v722
        %v808 = vunpack.c.l.b16 %v723
        %v809 = vunpack.c.h.b16 %v723
        %v810 = vunpack.c.l.b16 %v724
        %v811 = vunpack.c.h.b16 %v724
        %v812 = vunpack.c.l.b16 %v725
        %v813 = vunpack.c.h.b16 %v725
        %v814 = vunpack.c.l.b16 %v726
        %v815 = vunpack.c.h.b16 %v726
        %v816 = vunpack.c.l.b16 %v727
        %v817 = vunpack.c.h.b16 %v727
        %v818 = vunpack.c.l.b16 %v728
        %v819 = vunpack.c.h.b16 %v728
        %v820 = vunpack.c.l.b16 %v729
        %v821 = vunpack.c.h.b16 %v729
        %v822 = vunpack.c.l.b16 %v730
        %v823 = vunpack.c.h.b16 %v730
        %v824 = vunpack.c.l.b16 %v731
        %v825 = vunpack.c.h.b16 %v731
        %v826 = vunpack.c.l.b16 %v732
        %v827 = vunpack.c.h.b16 %v732
        %v828 = vunpack.c.l.b16 %v733
        %v829 = vunpack.c.h.b16 %v733
        %v830 = vpack.c.b16 %v768, %v766
        %v831 = vpack.c.b16 %v769, %v767
        %v832 = vpack.c.b16 %v772, %v770
        %v833 = vpack.c.b16 %v773, %v771
        %v834 = vpack.c.b16 %v776, %v774
        %v835 = vpack.c.b16 %v777, %v775
        %v836 = vpack.c.b16 %v780, %v778
        %v837 = vpack.c.b16 %v781, %v779
        %v838 = vpack.c.b16 %v784, %v782
        %v839 = vpack.c.b16 %v785, %v783
        %v840 = vpack.c.b16 %v788, %v786
        %v841 = vpack.c.b16 %v789, %v787
        %v842 = vpack.c.b16 %v792, %v790
        %v843 = vpack.c.b16 %v793, %v791
        %v844 = vpack.c.b16 %v796, %v794
        %v845 = vpack.c.b16 %v797, %v795
        %v846 = vpack.c.b16 %v800, %v798
        %v847 = vpack.c.b16 %v801, %v799
        %v848 = vpack.c.b16 %v804, %v802
        %v849 = vpack.c.b16 %v805, %v803
        %v850 = vpack.c.b16 %v808, %v806
        %v851 = vpack.c.b16 %v809, %v807
        %v852 = vpack.c.b16 %v812, %v810
        %v853 = vpack.c.b16 %v813, %v811
        %v854 = vpack.c.b16 %v816, %v814
        %v855 = vpack.c.b16 %v817, %v815
        %v856 = vpack.c.b16 %v820, %v818
        %v857 = vpack.c.b16 %v821, %v819
        %v858 = vpack.c.b16 %v824, %v822
        %v859 = vpack.c.b16 %v825, %v823
        %v860 = vpack.c.b16 %v828, %v826
        %v861 = vpack.c.b16 %v829, %v827
        %894 = vmatprep.subr.bf16.mxu0 %v845
        %895 = vmatpush1.bf16.msra.mxu0 %v844
        %896 = vmatprep.subr.bf16.mxu0 %v843
        %897 = vmatpush1.bf16.msra.mxu0 %v842
        %898 = vmatprep.subr.bf16.mxu0 %v841
        %899 = vmatpush1.bf16.msra.mxu0 %v840
        %900 = vmatprep.subr.bf16.mxu0 %v839
        %901 = vmatpush1.bf16.msra.mxu0 %v838
        %902 = vmatprep.subr.bf16.mxu0 %v837
        %903 = vmatpush1.bf16.msra.mxu0 %v836
        %904 = vmatprep.subr.bf16.mxu0 %v835
        %905 = vmatpush1.bf16.msra.mxu0 %v834
        %906 = vmatprep.subr.bf16.mxu0 %v833
        %907 = vmatpush1.bf16.msra.mxu0 %v832
        %908 = vmatprep.subr.bf16.mxu0 %v831
        %909 = vmatpush1.bf16.msra.mxu0 %v830
        %910 = vmatprep.subr.bf16.mxu0 %v861
        %911 = vmatpush2.bf16.msra.mxu0 %v860
        %912 = vmatprep.subr.bf16.mxu0 %v859
        %913 = vmatpush2.bf16.msra.mxu0 %v858
        %914 = vmatprep.subr.bf16.mxu0 %v857
        %915 = vmatpush2.bf16.msra.mxu0 %v856
        %916 = vmatprep.subr.bf16.mxu0 %v855
        %917 = vmatpush2.bf16.msra.mxu0 %v854
        %918 = vmatprep.subr.bf16.mxu0 %v853
        %919 = vmatpush2.bf16.msra.mxu0 %v852
        %920 = vmatprep.subr.bf16.mxu0 %v851
        %921 = vmatpush2.bf16.msra.mxu0 %v850
        %922 = vmatprep.subr.bf16.mxu0 %v849
        %923 = vmatpush2.bf16.msra.mxu0 %v848
        %924 = vmatprep.subr.bf16.mxu0 %v847
        %925 = vmatpush2.bf16.msra.mxu0 %v846
        %926 = vmatprep.mubr.bf16.mxu0 %v701
        %927 = vmatmul.mubr.bf16.gmra.mxu0 %v700
        %v928 = vpop.f32.mrf.mxu0
        %v929 = vadd.f32 0.0, %v928
        %v930 = vpop.f32.mrf.mxu0
        %v931 = vadd.f32 0.0, %v930
        %v932 = vpop.f32.mrf.mxu0
        %v933 = vpop.f32.mrf.mxu0
        %934 = vdwg.mxu0
        %v935 = vld [vmem:[%s1] sm:$0xff]
        %v936 = vld [vmem:[%s1 + $0x8] sm:$0xff]
        %v937 = vmul.f32 %v694, %v935
        %v938 = vmul.f32 %v696, %v936
        %v939 = vld [vmem:[%s2] sm:$0xff]
        %v940 = vld [vmem:[%s2 + $0x8] sm:$0xff]
        %v941 = vmul.f32 %v929, %v939
        %v942 = vmul.f32 %v931, %v940
        %v943 = vadd.f32 %v937, %v941
        %v944 = vadd.f32 %v938, %v942
        %946 = vrot.lane.b32.xlu0 %v943, 96
        %v947 = vpop.permute.xlu0 %946
        %949 = vrot.lane.b32.xlu0 %v943, 64
        %v950 = vpop.permute.xlu0 %949
        %952 = vrot.lane.b32.xlu0 %v943, 32
        %v953 = vpop.permute.xlu0 %952
        %956 = vrot.lane.b32.xlu0 %v944, 96
        %v957 = vpop.permute.xlu0 %956
        %959 = vrot.lane.b32.xlu0 %v944, 64
        %v960 = vpop.permute.xlu0 %959
        %962 = vrot.lane.b32.xlu0 %v944, 32
        %v963 = vpop.permute.xlu0 %962
        %v965 = vcombine.low %v943, %v950
        %v966 = vcombine.high %v943, %v950
        %v968 = vunpack.c.l.s4 1983009808
        %v969 = vunpack.c.0.s8 %v968
        %v970 = vlaneseq
        %v971 = vshrl.u32 %v970, 7
        %v972 = vsub.s32 %v969, %v971
        %v973 = vrot.slane %v965, %v972
        %v975 = vunpack.c.l.s4 1983009808
        %v976 = vunpack.c.0.s8 %v975
        %v977 = vlaneseq
        %v978 = vshrl.u32 %v977, 7
        %v979 = vsub.s32 %v976, %v978
        %v980 = vrot.slane %v966, %v979
        %v981 = vcombine.low %v947, %v953
        %v982 = vcombine.high %v947, %v953
        %v984 = vunpack.c.l.s4 1983009808
        %v985 = vunpack.c.0.s8 %v984
        %v986 = vlaneseq
        %v987 = vshrl.u32 %v986, 7
        %v988 = vsub.s32 %v985, %v987
        %v989 = vrot.slane %v981, %v988
        %v991 = vunpack.c.l.s4 1983009808
        %v992 = vunpack.c.0.s8 %v991
        %v993 = vlaneseq
        %v994 = vshrl.u32 %v993, 7
        %v995 = vsub.s32 %v992, %v994
        %v996 = vrot.slane %v982, %v995
        %v997 = vcombine.low %v944, %v960
        %v998 = vcombine.high %v944, %v960
        %v1000 = vunpack.c.l.s4 1983009808
        %v1001 = vunpack.c.0.s8 %v1000
        %v1002 = vlaneseq
        %v1003 = vshrl.u32 %v1002, 7
        %v1004 = vsub.s32 %v1001, %v1003
        %v1005 = vrot.slane %v997, %v1004
        %v1007 = vunpack.c.l.s4 1983009808
        %v1008 = vunpack.c.0.s8 %v1007
        %v1009 = vlaneseq
        %v1010 = vshrl.u32 %v1009, 7
        %v1011 = vsub.s32 %v1008, %v1010
        %v1012 = vrot.slane %v998, %v1011
        %v1013 = vcombine.low %v957, %v963
        %v1014 = vcombine.high %v957, %v963
        %v1016 = vunpack.c.l.s4 1983009808
        %v1017 = vunpack.c.0.s8 %v1016
        %v1018 = vlaneseq
        %v1019 = vshrl.u32 %v1018, 7
        %v1020 = vsub.s32 %v1017, %v1019
        %v1021 = vrot.slane %v1013, %v1020
        %v1023 = vunpack.c.l.s4 1983009808
        %v1024 = vunpack.c.0.s8 %v1023
        %v1025 = vlaneseq
        %v1026 = vshrl.u32 %v1025, 7
        %v1027 = vsub.s32 %v1024, %v1026
        %v1028 = vrot.slane %v1014, %v1027
        %v1029 = vcombine.low %v973, %v989
        %v1030 = vcombine.high %v973, %v989
        %v1032 = vunpack.c.l.s4 1934713408
        %v1033 = vunpack.c.0.s8 %v1032
        %v1034 = vlaneseq
        %v1035 = vshrl.u32 %v1034, 7
        %v1036 = vsub.s32 %v1033, %v1035
        %v1037 = vrot.slane %v1029, %v1036
        %v1039 = vunpack.c.l.s4 1934713408
        %v1040 = vunpack.c.0.s8 %v1039
        %v1041 = vlaneseq
        %v1042 = vshrl.u32 %v1041, 7
        %v1043 = vsub.s32 %v1040, %v1042
        %v1044 = vrot.slane %v1030, %v1043
        %v1045 = vcombine.low %v980, %v996
        %v1046 = vcombine.high %v980, %v996
        %v1048 = vunpack.c.l.s4 1934713408
        %v1049 = vunpack.c.0.s8 %v1048
        %v1050 = vlaneseq
        %v1051 = vshrl.u32 %v1050, 7
        %v1052 = vsub.s32 %v1049, %v1051
        %v1053 = vrot.slane %v1045, %v1052
        %v1055 = vunpack.c.l.s4 1934713408
        %v1056 = vunpack.c.0.s8 %v1055
        %v1057 = vlaneseq
        %v1058 = vshrl.u32 %v1057, 7
        %v1059 = vsub.s32 %v1056, %v1058
        %v1060 = vrot.slane %v1046, %v1059
        %v1061 = vcombine.low %v1005, %v1021
        %v1062 = vcombine.high %v1005, %v1021
        %v1064 = vunpack.c.l.s4 1934713408
        %v1065 = vunpack.c.0.s8 %v1064
        %v1066 = vlaneseq
        %v1067 = vshrl.u32 %v1066, 7
        %v1068 = vsub.s32 %v1065, %v1067
        %v1069 = vrot.slane %v1061, %v1068
        %v1071 = vunpack.c.l.s4 1934713408
        %v1072 = vunpack.c.0.s8 %v1071
        %v1073 = vlaneseq
        %v1074 = vshrl.u32 %v1073, 7
        %v1075 = vsub.s32 %v1072, %v1074
        %v1076 = vrot.slane %v1062, %v1075
        %v1077 = vcombine.low %v1012, %v1028
        %v1078 = vcombine.high %v1012, %v1028
        %v1080 = vunpack.c.l.s4 1934713408
        %v1081 = vunpack.c.0.s8 %v1080
        %v1082 = vlaneseq
        %v1083 = vshrl.u32 %v1082, 7
        %v1084 = vsub.s32 %v1081, %v1083
        %v1085 = vrot.slane %v1077, %v1084
        %v1087 = vunpack.c.l.s4 1934713408
        %v1088 = vunpack.c.0.s8 %v1087
        %v1089 = vlaneseq
        %v1090 = vshrl.u32 %v1089, 7
        %v1091 = vsub.s32 %v1088, %v1090
        %v1092 = vrot.slane %v1078, %v1091
        %v1093 = vcombine.low %v1037, %v1069
        %v1094 = vcombine.high %v1037, %v1069
        %v1095 = vcombine.low %v1044, %v1076
        %v1096 = vcombine.high %v1044, %v1076
        %v1097 = vcombine.low %v1053, %v1085
        %v1098 = vcombine.high %v1053, %v1085
        %v1099 = vcombine.low %v1060, %v1092
        %v1100 = vcombine.high %v1060, %v1092
        %v1101 = vcombine.low %v1093, %v1095
        %v1102 = vcombine.high %v1093, %v1095
        %v1104 = vunpack.c.l.s4 1983009808
        %v1105 = vunpack.c.0.s8 %v1104
        %v1106 = vlaneseq
        %v1107 = vshrl.u32 %v1106, 7
        %v1108 = vsub.s32 %v1105, %v1107
        %v1109 = vrot.slane %v1101, %v1108
        %v1111 = vunpack.c.l.s4 1983009808
        %v1112 = vunpack.c.0.s8 %v1111
        %v1113 = vlaneseq
        %v1114 = vshrl.u32 %v1113, 7
        %v1115 = vsub.s32 %v1112, %v1114
        %v1116 = vrot.slane %v1102, %v1115
        %v1117 = vcombine.low %v1094, %v1096
        %v1118 = vcombine.high %v1094, %v1096
        %v1120 = vunpack.c.l.s4 1983009808
        %v1121 = vunpack.c.0.s8 %v1120
        %v1122 = vlaneseq
        %v1123 = vshrl.u32 %v1122, 7
        %v1124 = vsub.s32 %v1121, %v1123
        %v1125 = vrot.slane %v1117, %v1124
        %v1127 = vunpack.c.l.s4 1983009808
        %v1128 = vunpack.c.0.s8 %v1127
        %v1129 = vlaneseq
        %v1130 = vshrl.u32 %v1129, 7
        %v1131 = vsub.s32 %v1128, %v1130
        %v1132 = vrot.slane %v1118, %v1131
        %v1133 = vcombine.low %v1097, %v1099
        %v1134 = vcombine.high %v1097, %v1099
        %v1136 = vunpack.c.l.s4 1983009808
        %v1137 = vunpack.c.0.s8 %v1136
        %v1138 = vlaneseq
        %v1139 = vshrl.u32 %v1138, 7
        %v1140 = vsub.s32 %v1137, %v1139
        %v1141 = vrot.slane %v1133, %v1140
        %v1143 = vunpack.c.l.s4 1983009808
        %v1144 = vunpack.c.0.s8 %v1143
        %v1145 = vlaneseq
        %v1146 = vshrl.u32 %v1145, 7
        %v1147 = vsub.s32 %v1144, %v1146
        %v1148 = vrot.slane %v1134, %v1147
        %v1149 = vcombine.low %v1098, %v1100
        %v1150 = vcombine.high %v1098, %v1100
        %v1152 = vunpack.c.l.s4 1983009808
        %v1153 = vunpack.c.0.s8 %v1152
        %v1154 = vlaneseq
        %v1155 = vshrl.u32 %v1154, 7
        %v1156 = vsub.s32 %v1153, %v1155
        %v1157 = vrot.slane %v1149, %v1156
        %v1159 = vunpack.c.l.s4 1983009808
        %v1160 = vunpack.c.0.s8 %v1159
        %v1161 = vlaneseq
        %v1162 = vshrl.u32 %v1161, 7
        %v1163 = vsub.s32 %v1160, %v1162
        %v1164 = vrot.slane %v1150, %v1163
        %v1165 = vcombine.low %v1109, %v1125
        %v1166 = vcombine.high %v1109, %v1125
        %v1168 = vunpack.c.l.s4 1934713408
        %v1169 = vunpack.c.0.s8 %v1168
        %v1170 = vlaneseq
        %v1171 = vshrl.u32 %v1170, 7
        %v1172 = vsub.s32 %v1169, %v1171
        %v1173 = vrot.slane %v1165, %v1172
        %v1175 = vunpack.c.l.s4 1934713408
        %v1176 = vunpack.c.0.s8 %v1175
        %v1177 = vlaneseq
        %v1178 = vshrl.u32 %v1177, 7
        %v1179 = vsub.s32 %v1176, %v1178
        %v1180 = vrot.slane %v1166, %v1179
        %v1181 = vcombine.low %v1116, %v1132
        %v1182 = vcombine.high %v1116, %v1132
        %v1184 = vunpack.c.l.s4 1934713408
        %v1185 = vunpack.c.0.s8 %v1184
        %v1186 = vlaneseq
        %v1187 = vshrl.u32 %v1186, 7
        %v1188 = vsub.s32 %v1185, %v1187
        %v1189 = vrot.slane %v1181, %v1188
        %v1191 = vunpack.c.l.s4 1934713408
        %v1192 = vunpack.c.0.s8 %v1191
        %v1193 = vlaneseq
        %v1194 = vshrl.u32 %v1193, 7
        %v1195 = vsub.s32 %v1192, %v1194
        %v1196 = vrot.slane %v1182, %v1195
        %v1197 = vcombine.low %v1141, %v1157
        %v1198 = vcombine.high %v1141, %v1157
        %v1200 = vunpack.c.l.s4 1934713408
        %v1201 = vunpack.c.0.s8 %v1200
        %v1202 = vlaneseq
        %v1203 = vshrl.u32 %v1202, 7
        %v1204 = vsub.s32 %v1201, %v1203
        %v1205 = vrot.slane %v1197, %v1204
        %v1207 = vunpack.c.l.s4 1934713408
        %v1208 = vunpack.c.0.s8 %v1207
        %v1209 = vlaneseq
        %v1210 = vshrl.u32 %v1209, 7
        %v1211 = vsub.s32 %v1208, %v1210
        %v1212 = vrot.slane %v1198, %v1211
        %v1213 = vcombine.low %v1148, %v1164
        %v1214 = vcombine.high %v1148, %v1164
        %v1216 = vunpack.c.l.s4 1934713408
        %v1217 = vunpack.c.0.s8 %v1216
        %v1218 = vlaneseq
        %v1219 = vshrl.u32 %v1218, 7
        %v1220 = vsub.s32 %v1217, %v1219
        %v1221 = vrot.slane %v1213, %v1220
        %v1223 = vunpack.c.l.s4 1934713408
        %v1224 = vunpack.c.0.s8 %v1223
        %v1225 = vlaneseq
        %v1226 = vshrl.u32 %v1225, 7
        %v1227 = vsub.s32 %v1224, %v1226
        %v1228 = vrot.slane %v1214, %v1227
        %v1229 = vcombine.low %v1173, %v1205
        %v1230 = vcombine.high %v1173, %v1205
        %v1231 = vcombine.low %v1180, %v1212
        %v1232 = vcombine.high %v1180, %v1212
        %v1233 = vcombine.low %v1189, %v1221
        %v1234 = vcombine.high %v1189, %v1221
        %v1235 = vcombine.low %v1196, %v1228
        %v1236 = vcombine.high %v1196, %v1228
        %v1237 = vpack.c.bf16 %v1230, %v1229
        %v1238 = vpack.c.bf16 %v1232, %v1231
        %v1239 = vpack.c.bf16 %v1233, %v1233
        %v1240 = vpack.c.bf16 %v1234, %v1234
        %v1241 = vld [vmem:[#allocation2] sm:$0xff]
        %v1242 = vld [vmem:[#allocation2 + $0x8] sm:$0xff]
        %vm1243 = vcmask 261120
        %v1245 = vsel %vm1243, %v1237, 0
        %v1248 = vsel %vm1243, %v1239, 0
        %1250 = vmatprep.subr.bf16.mxu0 0
        %1251 = vmatpush1.bf16.xpose.msra.mxu0 0
        %1252 = vmatprep.subr.bf16.mxu0 0
        %1253 = vmatpush1.bf16.xpose.msra.mxu0 0
        %1254 = vmatprep.subr.bf16.mxu0 0
        %1255 = vmatpush1.bf16.xpose.msra.mxu0 0
        %1256 = vmatprep.subr.bf16.mxu0 0
        %1257 = vmatpush1.bf16.xpose.msra.mxu0 0
        %1258 = vmatprep.subr.bf16.mxu0 0
        %1259 = vmatpush1.bf16.xpose.msra.mxu0 0
        %1260 = vmatprep.subr.bf16.mxu0 0
        %1261 = vmatpush1.bf16.xpose.msra.mxu0 0
        %1262 = vmatprep.subr.bf16.mxu0 0
        %1263 = vmatpush1.bf16.xpose.msra.mxu0 0
        %1264 = vmatprep.subr.bf16.mxu0 0
        %1265 = vmatpush1.bf16.xpose.msra.mxu0 %v1248
        %1266 = vmatprep.subr.bf16.mxu0 0
        %1267 = vmatpush2.bf16.xpose.msra.mxu0 0
        %1268 = vmatprep.subr.bf16.mxu0 0
        %1269 = vmatpush2.bf16.xpose.msra.mxu0 0
        %1270 = vmatprep.subr.bf16.mxu0 0
        %1271 = vmatpush2.bf16.xpose.msra.mxu0 0
        %1272 = vmatprep.subr.bf16.mxu0 0
        %1273 = vmatpush2.bf16.xpose.msra.mxu0 0
        %1274 = vmatprep.subr.bf16.mxu0 0
        %1275 = vmatpush2.bf16.xpose.msra.mxu0 0
        %1276 = vmatprep.subr.bf16.mxu0 0
        %1277 = vmatpush2.bf16.xpose.msra.mxu0 0
        %1278 = vmatprep.subr.bf16.mxu0 0
        %1279 = vmatpush2.bf16.xpose.msra.mxu0 0
        %1280 = vmatprep.subr.bf16.mxu0 0
        %1281 = vmatpush2.bf16.xpose.msra.mxu0 0
        %1282 = vmatprep.mubr.bf16.mxu0 0
        %1283 = vmatmul.mubr.bf16.gmra.mxu0 %v1245
        %v1284 = vpop.f32.mrf.mxu0
        %v1285 = vadd.f32 %v1241, %v1284
        %v1286 = vpop.f32.mrf.mxu0
        %v1287 = vpop.f32.mrf.mxu0
        %v1288 = vadd.f32 %v1242, %v1287
        %v1289 = vpop.f32.mrf.mxu0
        %1290 = vdwg.mxu0
        %v1292 = vsel %vm1243, %v1238, 0
        %v1295 = vsel %vm1243, %v1240, 0
        %1297 = vmatprep.subr.bf16.mxu0 0
        %1298 = vmatpush1.bf16.xpose.msra.mxu0 0
        %1299 = vmatprep.subr.bf16.mxu0 0
        %1300 = vmatpush1.bf16.xpose.msra.mxu0 0
        %1301 = vmatprep.subr.bf16.mxu0 0
        %1302 = vmatpush1.bf16.xpose.msra.mxu0 0
        %1303 = vmatprep.subr.bf16.mxu0 0
        %1304 = vmatpush1.bf16.xpose.msra.mxu0 0
        %1305 = vmatprep.subr.bf16.mxu0 0
        %1306 = vmatpush1.bf16.xpose.msra.mxu0 0
        %1307 = vmatprep.subr.bf16.mxu0 0
        %1308 = vmatpush1.bf16.xpose.msra.mxu0 0
        %1309 = vmatprep.subr.bf16.mxu0 0
        %1310 = vmatpush1.bf16.xpose.msra.mxu0 0
        %1311 = vmatprep.subr.bf16.mxu0 0
        %1312 = vmatpush1.bf16.xpose.msra.mxu0 %v1295
        %1313 = vmatprep.subr.bf16.mxu0 0
        %1314 = vmatpush2.bf16.xpose.msra.mxu0 0
        %1315 = vmatprep.subr.bf16.mxu0 0
        %1316 = vmatpush2.bf16.xpose.msra.mxu0 0
        %1317 = vmatprep.subr.bf16.mxu0 0
        %1318 = vmatpush2.bf16.xpose.msra.mxu0 0
        %1319 = vmatprep.subr.bf16.mxu0 0
        %1320 = vmatpush2.bf16.xpose.msra.mxu0 0
        %1321 = vmatprep.subr.bf16.mxu0 0
        %1322 = vmatpush2.bf16.xpose.msra.mxu0 0
        %1323 = vmatprep.subr.bf16.mxu0 0
        %1324 = vmatpush2.bf16.xpose.msra.mxu0 0
        %1325 = vmatprep.subr.bf16.mxu0 0
        %1326 = vmatpush2.bf16.xpose.msra.mxu0 0
        %1327 = vmatprep.subr.bf16.mxu0 0
        %1328 = vmatpush2.bf16.xpose.msra.mxu0 0
        %1329 = vmatprep.mubr.bf16.mxu0 0
        %1330 = vmatmul.mubr.bf16.gmra.mxu0 %v1292
        %v1331 = vpop.f32.mrf.mxu0
        %v1332 = vadd.f32 %v1241, %v1331
        %v1333 = vpop.f32.mrf.mxu0
        %v1334 = vpop.f32.mrf.mxu0
        %v1335 = vadd.f32 %v1242, %v1334
        %v1336 = vpop.f32.mrf.mxu0
        %1337 = vdwg.mxu0
        %vm1338 = vcmask 64512
        %v1339 = vsel %vm1338, %v1285, -inf
        %1340 = vmax.xlane.f32.xlu0 %v1339
        %v1341 = vpop.xlane.xlu0 %1340
        %v1342 = vsel %vm1338, %v1288, -inf
        %1343 = vmax.xlane.f32.xlu0 %v1342
        %v1344 = vpop.xlane.xlu0 %1343
        %v1345 = vsel %vm1338, %v1332, -inf
        %1346 = vmax.xlane.f32.xlu0 %v1345
        %v1347 = vpop.xlane.xlu0 %1346
        %v1348 = vsel %vm1338, %v1335, -inf
        %1349 = vmax.xlane.f32.xlu0 %v1348
        %v1350 = vpop.xlane.xlu0 %1349
        %v1351 = vsub.f32 %v1285, %v1341
        %v1352 = vsub.f32 %v1288, %v1344
        %v1353 = vsub.f32 %v1332, %v1347
        %v1354 = vsub.f32 %v1335, %v1350
        %v1355 = vmul.f32 %v1351, 1.442695
        %v1356 = vpow.pop %v1355
        %v1357 = vmul.f32 %v1352, 1.442695
        %v1358 = vpow.pop %v1357
        %v1359 = vmul.f32 %v1353, 1.442695
        %v1360 = vpow.pop %v1359
        %v1361 = vmul.f32 %v1354, 1.442695
        %v1362 = vpow.pop %v1361
        %v1363 = vsel %vm1338, %v1356, 0.0
        %1364 = vadd.xlane.f32.xlu0 %v1363
        %v1365 = vpop.xlane.xlu0 %1364
        %v1366 = vsel %vm1338, %v1358, 0.0
        %1367 = vadd.xlane.f32.xlu0 %v1366
        %v1368 = vpop.xlane.xlu0 %1367
        %v1369 = vsel %vm1338, %v1360, 0.0
        %1370 = vadd.xlane.f32.xlu0 %v1369
        %v1371 = vpop.xlane.xlu0 %1370
        %v1372 = vsel %vm1338, %v1362, 0.0
        %1373 = vadd.xlane.f32.xlu0 %v1372
        %v1374 = vpop.xlane.xlu0 %1373
        %v1375 = vpack.c.bf16 %v1358, %v1356
        %v1376 = vpack.c.bf16 %v1362, %v1360
        %v1377 = vpack.c.bf16 %v1235, %v1235
        %v1378 = vpack.c.bf16 %v1236, %v1236
        %v1380 = vsel %vm1338, %v1375, 0
        %vm1382 = vcmask 1043456
        %v1384 = vsel %vm1382, %v1377, 0
        %1386 = vmatprep.subr.bf16.mxu0 0
        %1387 = vmatpush1.bf16.msra.mxu0 0
        %1388 = vmatprep.subr.bf16.mxu0 0
        %1389 = vmatpush1.bf16.msra.mxu0 0
        %1390 = vmatprep.subr.bf16.mxu0 0
        %1391 = vmatpush1.bf16.msra.mxu0 0
        %1392 = vmatprep.subr.bf16.mxu0 0
        %1393 = vmatpush1.bf16.msra.mxu0 0
        %1394 = vmatprep.subr.bf16.mxu0 0
        %1395 = vmatpush1.bf16.msra.mxu0 0
        %1396 = vmatprep.subr.bf16.mxu0 0
        %1397 = vmatpush1.bf16.msra.mxu0 0
        %1398 = vmatprep.subr.bf16.mxu0 0
        %1399 = vmatpush1.bf16.msra.mxu0 0
        %1400 = vmatprep.subr.bf16.mxu0 0
        %1401 = vmatpush1.bf16.msra.mxu0 %v1384
        %1402 = vmatprep.subr.bf16.mxu0 0
        %1403 = vmatpush2.bf16.msra.mxu0 0
        %1404 = vmatprep.subr.bf16.mxu0 0
        %1405 = vmatpush2.bf16.msra.mxu0 0
        %1406 = vmatprep.subr.bf16.mxu0 0
        %1407 = vmatpush2.bf16.msra.mxu0 0
        %1408 = vmatprep.subr.bf16.mxu0 0
        %1409 = vmatpush2.bf16.msra.mxu0 0
        %1410 = vmatprep.subr.bf16.mxu0 0
        %1411 = vmatpush2.bf16.msra.mxu0 0
        %1412 = vmatprep.subr.bf16.mxu0 0
        %1413 = vmatpush2.bf16.msra.mxu0 0
        %1414 = vmatprep.subr.bf16.mxu0 0
        %1415 = vmatpush2.bf16.msra.mxu0 0
        %1416 = vmatprep.subr.bf16.mxu0 0
        %1417 = vmatpush2.bf16.msra.mxu0 0
        %1418 = vmatprep.mubr.bf16.mxu0 0
        %1419 = vmatmul.mubr.bf16.gmra.mxu0 %v1380
        %v1420 = vpop.f32.mrf.mxu0
        %v1421 = vadd.f32 0.0, %v1420
        %v1422 = vpop.f32.mrf.mxu0
        %v1423 = vpop.f32.mrf.mxu0
        %v1424 = vadd.f32 0.0, %v1423
        %v1425 = vpop.f32.mrf.mxu0
        %1426 = vdwg.mxu0
        %v1428 = vsel %vm1338, %v1376, 0
        %v1431 = vsel %vm1382, %v1378, 0
        %1433 = vmatprep.subr.bf16.mxu0 0
        %1434 = vmatpush1.bf16.msra.mxu0 0
        %1435 = vmatprep.subr.bf16.mxu0 0
        %1436 = vmatpush1.bf16.msra.mxu0 0
        %1437 = vmatprep.subr.bf16.mxu0 0
        %1438 = vmatpush1.bf16.msra.mxu0 0
        %1439 = vmatprep.subr.bf16.mxu0 0
        %1440 = vmatpush1.bf16.msra.mxu0 0
        %1441 = vmatprep.subr.bf16.mxu0 0
        %1442 = vmatpush1.bf16.msra.mxu0 0
        %1443 = vmatprep.subr.bf16.mxu0 0
        %1444 = vmatpush1.bf16.msra.mxu0 0
        %1445 = vmatprep.subr.bf16.mxu0 0
        %1446 = vmatpush1.bf16.msra.mxu0 0
        %1447 = vmatprep.subr.bf16.mxu0 0
        %1448 = vmatpush1.bf16.msra.mxu0 %v1431
        %1449 = vmatprep.subr.bf16.mxu0 0
        %1450 = vmatpush2.bf16.msra.mxu0 0
        %1451 = vmatprep.subr.bf16.mxu0 0
        %1452 = vmatpush2.bf16.msra.mxu0 0
        %1453 = vmatprep.subr.bf16.mxu0 0
        %1454 = vmatpush2.bf16.msra.mxu0 0
        %1455 = vmatprep.subr.bf16.mxu0 0
        %1456 = vmatpush2.bf16.msra.mxu0 0
        %1457 = vmatprep.subr.bf16.mxu0 0
        %1458 = vmatpush2.bf16.msra.mxu0 0
        %1459 = vmatprep.subr.bf16.mxu0 0
        %1460 = vmatpush2.bf16.msra.mxu0 0
        %1461 = vmatprep.subr.bf16.mxu0 0
        %1462 = vmatpush2.bf16.msra.mxu0 0
        %1463 = vmatprep.subr.bf16.mxu0 0
        %1464 = vmatpush2.bf16.msra.mxu0 0
        %1465 = vmatprep.mubr.bf16.mxu0 0
        %1466 = vmatmul.mubr.bf16.gmra.mxu0 %v1428
        %v1467 = vpop.f32.mrf.mxu0
        %v1468 = vadd.f32 0.0, %v1467
        %v1469 = vpop.f32.mrf.mxu0
        %v1470 = vpop.f32.mrf.mxu0
        %v1471 = vadd.f32 0.0, %v1470
        %v1472 = vpop.f32.mrf.mxu0
        %1473 = vdwg.mxu0
        %v1474 = vrcp.pop %v1365
        %v1475 = vrcp.pop %v1368
        %v1476 = vrcp.pop %v1371
        %v1477 = vrcp.pop %v1374
        %v1478 = vmul.f32 %v1421, %v1474
        %v1479 = vmul.f32 %v1424, %v1475
        %v1480 = vmul.f32 %v1468, %v1476
        %v1481 = vmul.f32 %v1471, %v1477
        %v1482 = vcombine.low %v1478, %v1480
        %v1483 = vcombine.high %v1478, %v1480
        %v1485 = vunpack.c.l.s4 1983009808
        %v1486 = vunpack.c.0.s8 %v1485
        %v1487 = vlaneseq
        %v1488 = vshrl.u32 %v1487, 7
        %v1489 = vsub.s32 %v1486, %v1488
        %v1490 = vrot.slane %v1482, %v1489
        %v1492 = vunpack.c.l.s4 1983009808
        %v1493 = vunpack.c.0.s8 %v1492
        %v1494 = vlaneseq
        %v1495 = vshrl.u32 %v1494, 7
        %v1496 = vsub.s32 %v1493, %v1495
        %v1497 = vrot.slane %v1483, %v1496
        %v1498 = vcombine.low %v1479, %v1481
        %v1499 = vcombine.high %v1479, %v1481
        %v1501 = vunpack.c.l.s4 1983009808
        %v1502 = vunpack.c.0.s8 %v1501
        %v1503 = vlaneseq
        %v1504 = vshrl.u32 %v1503, 7
        %v1505 = vsub.s32 %v1502, %v1504
        %v1506 = vrot.slane %v1498, %v1505
        %v1508 = vunpack.c.l.s4 1983009808
        %v1509 = vunpack.c.0.s8 %v1508
        %v1510 = vlaneseq
        %v1511 = vshrl.u32 %v1510, 7
        %v1512 = vsub.s32 %v1509, %v1511
        %v1513 = vrot.slane %v1499, %v1512
        %v1514 = vcombine.low %v1490, %v1506
        %v1515 = vcombine.high %v1490, %v1506
        %v1517 = vunpack.c.l.s4 1934713408
        %v1518 = vunpack.c.0.s8 %v1517
        %v1519 = vlaneseq
        %v1520 = vshrl.u32 %v1519, 7
        %v1521 = vsub.s32 %v1518, %v1520
        %v1522 = vrot.slane %v1514, %v1521
        %v1524 = vunpack.c.l.s4 1934713408
        %v1525 = vunpack.c.0.s8 %v1524
        %v1526 = vlaneseq
        %v1527 = vshrl.u32 %v1526, 7
        %v1528 = vsub.s32 %v1525, %v1527
        %v1529 = vrot.slane %v1515, %v1528
        %v1530 = vcombine.low %v1497, %v1513
        %v1531 = vcombine.high %v1497, %v1513
        %v1533 = vunpack.c.l.s4 1934713408
        %v1534 = vunpack.c.0.s8 %v1533
        %v1535 = vlaneseq
        %v1536 = vshrl.u32 %v1535, 7
        %v1537 = vsub.s32 %v1534, %v1536
        %v1538 = vrot.slane %v1530, %v1537
        %v1540 = vunpack.c.l.s4 1934713408
        %v1541 = vunpack.c.0.s8 %v1540
        %v1542 = vlaneseq
        %v1543 = vshrl.u32 %v1542, 7
        %v1544 = vsub.s32 %v1541, %v1543
        %v1545 = vrot.slane %v1531, %v1544
        %v1546 = vcombine.high %v1522, 0.0
        %v1547 = vcombine.high %v1529, 0.0
        %v1548 = vcombine.high %v1538, 0.0
        %v1549 = vcombine.high %v1545, 0.0
        %v1550 = vcombine.low %v1522, %v1529
        %v1552 = vunpack.c.l.s4 1983009808
        %v1553 = vunpack.c.0.s8 %v1552
        %v1554 = vlaneseq
        %v1555 = vshrl.u32 %v1554, 7
        %v1556 = vsub.s32 %v1553, %v1555
        %v1557 = vrot.slane %v1550, %v1556
        %v1558 = vcombine.low %v1546, %v1547
        %v1560 = vunpack.c.l.s4 1983009808
        %v1561 = vunpack.c.0.s8 %v1560
        %v1562 = vlaneseq
        %v1563 = vshrl.u32 %v1562, 7
        %v1564 = vsub.s32 %v1561, %v1563
        %v1565 = vrot.slane %v1558, %v1564
        %v1566 = vcombine.low %v1538, %v1545
        %v1568 = vunpack.c.l.s4 1983009808
        %v1569 = vunpack.c.0.s8 %v1568
        %v1570 = vlaneseq
        %v1571 = vshrl.u32 %v1570, 7
        %v1572 = vsub.s32 %v1569, %v1571
        %v1573 = vrot.slane %v1566, %v1572
        %v1574 = vcombine.low %v1548, %v1549
        %v1576 = vunpack.c.l.s4 1983009808
        %v1577 = vunpack.c.0.s8 %v1576
        %v1578 = vlaneseq
        %v1579 = vshrl.u32 %v1578, 7
        %v1580 = vsub.s32 %v1577, %v1579
        %v1581 = vrot.slane %v1574, %v1580
        %v1582 = vcombine.low %v1557, %v1565
        %v1583 = vcombine.high %v1557, %v1565
        %v1585 = vunpack.c.l.s4 1934713408
        %v1586 = vunpack.c.0.s8 %v1585
        %v1587 = vlaneseq
        %v1588 = vshrl.u32 %v1587, 7
        %v1589 = vsub.s32 %v1586, %v1588
        %v1590 = vrot.slane %v1582, %v1589
        %v1592 = vunpack.c.l.s4 1934713408
        %v1593 = vunpack.c.0.s8 %v1592
        %v1594 = vlaneseq
        %v1595 = vshrl.u32 %v1594, 7
        %v1596 = vsub.s32 %v1593, %v1595
        %v1597 = vrot.slane %v1583, %v1596
        %v1598 = vcombine.low %v1573, %v1581
        %v1599 = vcombine.high %v1573, %v1581
        %v1601 = vunpack.c.l.s4 1934713408
        %v1602 = vunpack.c.0.s8 %v1601
        %v1603 = vlaneseq
        %v1604 = vshrl.u32 %v1603, 7
        %v1605 = vsub.s32 %v1602, %v1604
        %v1606 = vrot.slane %v1598, %v1605
        %v1608 = vunpack.c.l.s4 1934713408
        %v1609 = vunpack.c.0.s8 %v1608
        %v1610 = vlaneseq
        %v1611 = vshrl.u32 %v1610, 7
        %v1612 = vsub.s32 %v1609, %v1611
        %v1613 = vrot.slane %v1599, %v1612
        %v1614 = vcombine.low %v1590, %v1606
        %v1615 = vcombine.high %v1590, %v1606
        %v1616 = vcombine.low %v1597, %v1613
        %v1617 = vcombine.high %v1597, %v1613
        %1619 = vrot.lane.b32.xlu0 %v1615, 32
        %v1620 = vpop.permute.xlu0 %1619
        %1623 = vrot.lane.b32.xlu0 %v1616, 64
        %v1624 = vpop.permute.xlu0 %1623
        %1627 = vrot.lane.b32.xlu0 %v1617, 96
        %v1628 = vpop.permute.xlu0 %1627
        %v1630 = vsel %vm1243, %v1614, %v1620
        %vm1631 = vcmask 523264
        %v1632 = vsel %vm1631, %v1630, %v1624
        %vm1633 = vcmask 785408
        %v1634 = vsel %vm1633, %v1632, %v1628
        %v1635 = vpack.c.bf16 %v1634, %v1634
        %v1636 = vld [vmem:[%s488] sm:$0xf]
        %v1637 = vld [vmem:[%s488 + $0x4] sm:$0xf]
        %v1638 = vld [vmem:[%s488 + $0x8] sm:$0xf]
        %v1639 = vld [vmem:[%s488 + $0xc] sm:$0xf]
        %v1640 = vld [vmem:[%s488 + $0x10] sm:$0xf]
        %v1641 = vld [vmem:[%s488 + $0x14] sm:$0xf]
        %v1642 = vld [vmem:[%s488 + $0x18] sm:$0xf]
        %v1643 = vld [vmem:[%s488 + $0x1c] sm:$0xf]
        %v1644 = vld [vmem:[%s488 + $0x20] sm:$0xf]
        %v1645 = vld [vmem:[%s488 + $0x24] sm:$0xf]
        %v1646 = vld [vmem:[%s488 + $0x28] sm:$0xf]
        %v1647 = vld [vmem:[%s488 + $0x2c] sm:$0xf]
        %v1648 = vld [vmem:[%s488 + $0x30] sm:$0xf]
        %v1649 = vld [vmem:[%s488 + $0x34] sm:$0xf]
        %v1650 = vld [vmem:[%s488 + $0x38] sm:$0xf]
        %v1651 = vld [vmem:[%s488 + $0x3c] sm:$0xf]
        %v1668 = vunpack.c.l.b16 %v1636
        %v1669 = vunpack.c.l.b16 %v1637
        %v1670 = vunpack.c.l.b16 %v1638
        %v1671 = vunpack.c.l.b16 %v1639
        %v1672 = vunpack.c.l.b16 %v1640
        %v1673 = vunpack.c.l.b16 %v1641
        %v1674 = vunpack.c.l.b16 %v1642
        %v1675 = vunpack.c.l.b16 %v1643
        %v1676 = vunpack.c.l.b16 %v1644
        %v1677 = vunpack.c.l.b16 %v1645
        %v1678 = vunpack.c.l.b16 %v1646
        %v1679 = vunpack.c.l.b16 %v1647
        %v1680 = vunpack.c.l.b16 %v1648
        %v1681 = vunpack.c.l.b16 %v1649
        %v1682 = vunpack.c.l.b16 %v1650
        %v1683 = vunpack.c.l.b16 %v1651
        %v1684 = vpack.c.b16 %v1669, %v1668
        %v1685 = vpack.c.b16 %v1671, %v1670
        %v1686 = vpack.c.b16 %v1673, %v1672
        %v1687 = vpack.c.b16 %v1675, %v1674
        %v1688 = vpack.c.b16 %v1677, %v1676
        %v1689 = vpack.c.b16 %v1679, %v1678
        %v1690 = vpack.c.b16 %v1681, %v1680
        %v1691 = vpack.c.b16 %v1683, %v1682
        %1700 = vmatprep.subr.bf16.mxu0 0
        %1701 = vmatpush1.bf16.msra.mxu0 %v1691
        %1702 = vmatprep.subr.bf16.mxu0 0
        %1703 = vmatpush1.bf16.msra.mxu0 %v1690
        %1704 = vmatprep.subr.bf16.mxu0 0
        %1705 = vmatpush1.bf16.msra.mxu0 %v1689
        %1706 = vmatprep.subr.bf16.mxu0 0
        %1707 = vmatpush1.bf16.msra.mxu0 %v1688
        %1708 = vmatprep.subr.bf16.mxu0 0
        %1709 = vmatpush1.bf16.msra.mxu0 %v1687
        %1710 = vmatprep.subr.bf16.mxu0 0
        %1711 = vmatpush1.bf16.msra.mxu0 %v1686
        %1712 = vmatprep.subr.bf16.mxu0 0
        %1713 = vmatpush1.bf16.msra.mxu0 %v1685
        %1714 = vmatprep.subr.bf16.mxu0 0
        %1715 = vmatpush1.bf16.msra.mxu0 %v1684
        %1716 = vmatprep.subr.bf16.mxu0 0
        %1717 = vmatpush2.bf16.msra.mxu0 0
        %1718 = vmatprep.subr.bf16.mxu0 0
        %1719 = vmatpush2.bf16.msra.mxu0 0
        %1720 = vmatprep.subr.bf16.mxu0 0
        %1721 = vmatpush2.bf16.msra.mxu0 0
        %1722 = vmatprep.subr.bf16.mxu0 0
        %1723 = vmatpush2.bf16.msra.mxu0 0
        %1724 = vmatprep.subr.bf16.mxu0 0
        %1725 = vmatpush2.bf16.msra.mxu0 0
        %1726 = vmatprep.subr.bf16.mxu0 0
        %1727 = vmatpush2.bf16.msra.mxu0 0
        %1728 = vmatprep.subr.bf16.mxu0 0
        %1729 = vmatpush2.bf16.msra.mxu0 0
        %1730 = vmatprep.subr.bf16.mxu0 0
        %1731 = vmatpush2.bf16.msra.mxu0 0
        %1732 = vmatprep.mubr.bf16.mxu0 0
        %1733 = vmatmul.mubr.bf16.gmra.mxu0 %v1635
        %v1734 = vpop.f32.mrf.mxu0
        %v1735 = vadd.f32 0.0, %v1734
        %v1736 = vpop.f32.mrf.mxu0
        %v1737 = vpop.f32.mrf.mxu0
        %v1738 = vpop.f32.mrf.mxu0
        %1739 = vdwg.mxu0
        %v1740 = vadd.f32 %v545, %v1735
        %v1741 = vld [vmem:[%s491] sm:$0x1]
        %v1742 = vmul.f32 %v1740, %v1740
        %1743 = vadd.xlane.f32.xlu0 %v1742
        %v1744 = vpop.xlane.xlu0 %1743
        %v1745 = vmul.f32 %v1744, %v550
        %v1746 = vadd.f32 %v1745, 1e-05
        %v1747 = vrsqrt.pop %v1746
        %v1748 = vmul.f32 %v1740, %v1747
        %v1750 = vlaneseq
        %v1751 = vshrl.u32 %v1750, 7
        %v1752 = vsub.s32 0, %v1751
        %v1753 = vrot.slane %v1741, %v1752
        %v1755 = vmul.f32 %v1748, %v1753
        %v1756 = vpack.c.bf16 %v1755, %v1755
        %v1757 = vld [vmem:[%s496] sm:$0xff]
        %v1758 = vld [vmem:[%s496 + $0x8] sm:$0xff]
        %v1759 = vld [vmem:[%s496 + $0x10] sm:$0xff]
        %v1760 = vld [vmem:[%s496 + $0x18] sm:$0xff]
        %v1761 = vld [vmem:[%s496 + $0x20] sm:$0xff]
        %v1762 = vld [vmem:[%s496 + $0x28] sm:$0xff]
        %v1763 = vld [vmem:[%s496 + $0x30] sm:$0xff]
        %v1764 = vld [vmem:[%s496 + $0x38] sm:$0xff]
        %v1765 = vld [vmem:[%s496 + $0x40] sm:$0xff]
        %v1766 = vld [vmem:[%s496 + $0x48] sm:$0xff]
        %v1767 = vld [vmem:[%s496 + $0x50] sm:$0xff]
        %v1768 = vld [vmem:[%s496 + $0x58] sm:$0xff]
        %v1769 = vld [vmem:[%s496 + $0x60] sm:$0xff]
        %v1770 = vld [vmem:[%s496 + $0x68] sm:$0xff]
        %v1771 = vld [vmem:[%s496 + $0x70] sm:$0xff]
        %v1772 = vld [vmem:[%s496 + $0x78] sm:$0xff]
        %v1773 = vld [vmem:[%s496 + $0x80] sm:$0xff]
        %v1774 = vld [vmem:[%s496 + $0x88] sm:$0xff]
        %v1775 = vld [vmem:[%s496 + $0x90] sm:$0xff]
        %v1776 = vld [vmem:[%s496 + $0x98] sm:$0xff]
        %v1777 = vld [vmem:[%s496 + $0xa0] sm:$0xff]
        %v1778 = vld [vmem:[%s496 + $0xa8] sm:$0xff]
        %v1779 = vld [vmem:[%s496 + $0xb0] sm:$0xff]
        %v1780 = vld [vmem:[%s496 + $0xb8] sm:$0xff]
        %v1781 = vld [vmem:[%s496 + $0xc0] sm:$0xff]
        %v1782 = vld [vmem:[%s496 + $0xc8] sm:$0xff]
        %v1783 = vld [vmem:[%s496 + $0xd0] sm:$0xff]
        %v1784 = vld [vmem:[%s496 + $0xd8] sm:$0xff]
        %v1785 = vld [vmem:[%s496 + $0xe0] sm:$0xff]
        %v1786 = vld [vmem:[%s496 + $0xe8] sm:$0xff]
        %v1787 = vld [vmem:[%s496 + $0xf0] sm:$0xff]
        %v1788 = vld [vmem:[%s496 + $0xf8] sm:$0xff]
        %v1821 = vunpack.c.l.b16 %v1757
        %v1822 = vunpack.c.h.b16 %v1757
        %v1823 = vunpack.c.l.b16 %v1758
        %v1824 = vunpack.c.h.b16 %v1758
        %v1825 = vunpack.c.l.b16 %v1759
        %v1826 = vunpack.c.h.b16 %v1759
        %v1827 = vunpack.c.l.b16 %v1760
        %v1828 = vunpack.c.h.b16 %v1760
        %v1829 = vunpack.c.l.b16 %v1761
        %v1830 = vunpack.c.h.b16 %v1761
        %v1831 = vunpack.c.l.b16 %v1762
        %v1832 = vunpack.c.h.b16 %v1762
        %v1833 = vunpack.c.l.b16 %v1763
        %v1834 = vunpack.c.h.b16 %v1763
        %v1835 = vunpack.c.l.b16 %v1764
        %v1836 = vunpack.c.h.b16 %v1764
        %v1837 = vunpack.c.l.b16 %v1765
        %v1838 = vunpack.c.h.b16 %v1765
        %v1839 = vunpack.c.l.b16 %v1766
        %v1840 = vunpack.c.h.b16 %v1766
        %v1841 = vunpack.c.l.b16 %v1767
        %v1842 = vunpack.c.h.b16 %v1767
        %v1843 = vunpack.c.l.b16 %v1768
        %v1844 = vunpack.c.h.b16 %v1768
        %v1845 = vunpack.c.l.b16 %v1769
        %v1846 = vunpack.c.h.b16 %v1769
        %v1847 = vunpack.c.l.b16 %v1770
        %v1848 = vunpack.c.h.b16 %v1770
        %v1849 = vunpack.c.l.b16 %v1771
        %v1850 = vunpack.c.h.b16 %v1771
        %v1851 = vunpack.c.l.b16 %v1772
        %v1852 = vunpack.c.h.b16 %v1772
        %v1853 = vunpack.c.l.b16 %v1773
        %v1854 = vunpack.c.h.b16 %v1773
        %v1855 = vunpack.c.l.b16 %v1774
        %v1856 = vunpack.c.h.b16 %v1774
        %v1857 = vunpack.c.l.b16 %v1775
        %v1858 = vunpack.c.h.b16 %v1775
        %v1859 = vunpack.c.l.b16 %v1776
        %v1860 = vunpack.c.h.b16 %v1776
        %v1861 = vunpack.c.l.b16 %v1777
        %v1862 = vunpack.c.h.b16 %v1777
        %v1863 = vunpack.c.l.b16 %v1778
        %v1864 = vunpack.c.h.b16 %v1778
        %v1865 = vunpack.c.l.b16 %v1779
        %v1866 = vunpack.c.h.b16 %v1779
        %v1867 = vunpack.c.l.b16 %v1780
        %v1868 = vunpack.c.h.b16 %v1780
        %v1869 = vunpack.c.l.b16 %v1781
        %v1870 = vunpack.c.h.b16 %v1781
        %v1871 = vunpack.c.l.b16 %v1782
        %v1872 = vunpack.c.h.b16 %v1782
        %v1873 = vunpack.c.l.b16 %v1783
        %v1874 = vunpack.c.h.b16 %v1783
        %v1875 = vunpack.c.l.b16 %v1784
        %v1876 = vunpack.c.h.b16 %v1784
        %v1877 = vunpack.c.l.b16 %v1785
        %v1878 = vunpack.c.h.b16 %v1785
        %v1879 = vunpack.c.l.b16 %v1786
        %v1880 = vunpack.c.h.b16 %v1786
        %v1881 = vunpack.c.l.b16 %v1787
        %v1882 = vunpack.c.h.b16 %v1787
        %v1883 = vunpack.c.l.b16 %v1788
        %v1884 = vunpack.c.h.b16 %v1788
        %v1885 = vpack.c.b16 %v1825, %v1821
        %v1886 = vpack.c.b16 %v1826, %v1822
        %v1887 = vpack.c.b16 %v1827, %v1823
        %v1888 = vpack.c.b16 %v1828, %v1824
        %v1889 = vpack.c.b16 %v1833, %v1829
        %v1890 = vpack.c.b16 %v1834, %v1830
        %v1891 = vpack.c.b16 %v1835, %v1831
        %v1892 = vpack.c.b16 %v1836, %v1832
        %v1893 = vpack.c.b16 %v1841, %v1837
        %v1894 = vpack.c.b16 %v1842, %v1838
        %v1895 = vpack.c.b16 %v1843, %v1839
        %v1896 = vpack.c.b16 %v1844, %v1840
        %v1897 = vpack.c.b16 %v1849, %v1845
        %v1898 = vpack.c.b16 %v1850, %v1846
        %v1899 = vpack.c.b16 %v1851, %v1847
        %v1900 = vpack.c.b16 %v1852, %v1848
        %v1901 = vpack.c.b16 %v1857, %v1853
        %v1902 = vpack.c.b16 %v1858, %v1854
        %v1903 = vpack.c.b16 %v1859, %v1855
        %v1904 = vpack.c.b16 %v1860, %v1856
        %v1905 = vpack.c.b16 %v1865, %v1861
        %v1906 = vpack.c.b16 %v1866, %v1862
        %v1907 = vpack.c.b16 %v1867, %v1863
        %v1908 = vpack.c.b16 %v1868, %v1864
        %v1909 = vpack.c.b16 %v1873, %v1869
        %v1910 = vpack.c.b16 %v1874, %v1870
        %v1911 = vpack.c.b16 %v1875, %v1871
        %v1912 = vpack.c.b16 %v1876, %v1872
        %v1913 = vpack.c.b16 %v1881, %v1877
        %v1914 = vpack.c.b16 %v1882, %v1878
        %v1915 = vpack.c.b16 %v1883, %v1879
        %v1916 = vpack.c.b16 %v1884, %v1880
        %1949 = vmatprep.subr.bf16.mxu0 %v1914
        %1950 = vmatpush1.bf16.msra.mxu0 %v1913
        %1951 = vmatprep.subr.bf16.mxu0 %v1910
        %1952 = vmatpush1.bf16.msra.mxu0 %v1909
        %1953 = vmatprep.subr.bf16.mxu0 %v1906
        %1954 = vmatpush1.bf16.msra.mxu0 %v1905
        %1955 = vmatprep.subr.bf16.mxu0 %v1902
        %1956 = vmatpush1.bf16.msra.mxu0 %v1901
        %1957 = vmatprep.subr.bf16.mxu0 %v1898
        %1958 = vmatpush1.bf16.msra.mxu0 %v1897
        %1959 = vmatprep.subr.bf16.mxu0 %v1894
        %1960 = vmatpush1.bf16.msra.mxu0 %v1893
        %1961 = vmatprep.subr.bf16.mxu0 %v1890
        %1962 = vmatpush1.bf16.msra.mxu0 %v1889
        %1963 = vmatprep.subr.bf16.mxu0 %v1886
        %1964 = vmatpush1.bf16.msra.mxu0 %v1885
        %1965 = vmatprep.subr.bf16.mxu0 0
        %1966 = vmatpush2.bf16.msra.mxu0 0
        %1967 = vmatprep.subr.bf16.mxu0 0
        %1968 = vmatpush2.bf16.msra.mxu0 0
        %1969 = vmatprep.subr.bf16.mxu0 0
        %1970 = vmatpush2.bf16.msra.mxu0 0
        %1971 = vmatprep.subr.bf16.mxu0 0
        %1972 = vmatpush2.bf16.msra.mxu0 0
        %1973 = vmatprep.subr.bf16.mxu0 0
        %1974 = vmatpush2.bf16.msra.mxu0 0
        %1975 = vmatprep.subr.bf16.mxu0 0
        %1976 = vmatpush2.bf16.msra.mxu0 0
        %1977 = vmatprep.subr.bf16.mxu0 0
        %1978 = vmatpush2.bf16.msra.mxu0 0
        %1979 = vmatprep.subr.bf16.mxu0 0
        %1980 = vmatpush2.bf16.msra.mxu0 0
        %1981 = vmatprep.mubr.bf16.mxu0 0
        %1982 = vmatmul.mubr.bf16.gmra.mxu0 %v1756
        %v1983 = vpop.f32.mrf.mxu0
        %v1984 = vadd.f32 0.0, %v1983
        %v1985 = vpop.f32.mrf.mxu0
        %v1986 = vadd.f32 0.0, %v1985
        %v1987 = vpop.f32.mrf.mxu0
        %v1988 = vpop.f32.mrf.mxu0
        %1989 = vdwg.mxu0
        %1990 = vmatprep.subr.bf16.mxu0 %v1916
        %1991 = vmatpush1.bf16.msra.mxu0 %v1915
        %1992 = vmatprep.subr.bf16.mxu0 %v1912
        %1993 = vmatpush1.bf16.msra.mxu0 %v1911
        %1994 = vmatprep.subr.bf16.mxu0 %v1908
        %1995 = vmatpush1.bf16.msra.mxu0 %v1907
        %1996 = vmatprep.subr.bf16.mxu0 %v1904
        %1997 = vmatpush1.bf16.msra.mxu0 %v1903
        %1998 = vmatprep.subr.bf16.mxu0 %v1900
        %1999 = vmatpush1.bf16.msra.mxu0 %v1899
        %2000 = vmatprep.subr.bf16.mxu0 %v1896
        %2001 = vmatpush1.bf16.msra.mxu0 %v1895
        %2002 = vmatprep.subr.bf16.mxu0 %v1892
        %2003 = vmatpush1.bf16.msra.mxu0 %v1891
        %2004 = vmatprep.subr.bf16.mxu0 %v1888
        %2005 = vmatpush1.bf16.msra.mxu0 %v1887
        %2006 = vmatprep.subr.bf16.mxu0 0
        %2007 = vmatpush2.bf16.msra.mxu0 0
        %2008 = vmatprep.subr.bf16.mxu0 0
        %2009 = vmatpush2.bf16.msra.mxu0 0
        %2010 = vmatprep.subr.bf16.mxu0 0
        %2011 = vmatpush2.bf16.msra.mxu0 0
        %2012 = vmatprep.subr.bf16.mxu0 0
        %2013 = vmatpush2.bf16.msra.mxu0 0
        %2014 = vmatprep.subr.bf16.mxu0 0
        %2015 = vmatpush2.bf16.msra.mxu0 0
        %2016 = vmatprep.subr.bf16.mxu0 0
        %2017 = vmatpush2.bf16.msra.mxu0 0
        %2018 = vmatprep.subr.bf16.mxu0 0
        %2019 = vmatpush2.bf16.msra.mxu0 0
        %2020 = vmatprep.subr.bf16.mxu0 0
        %2021 = vmatpush2.bf16.msra.mxu0 0
        %2022 = vmatprep.mubr.bf16.mxu0 0
        %2023 = vmatmul.mubr.bf16.gmra.mxu0 %v1756
        %v2024 = vpop.f32.mrf.mxu0
        %v2025 = vadd.f32 0.0, %v2024
        %v2026 = vpop.f32.mrf.mxu0
        %v2027 = vadd.f32 0.0, %v2026
        %v2028 = vpop.f32.mrf.mxu0
        %v2029 = vpop.f32.mrf.mxu0
        %2030 = vdwg.mxu0
        %v2031 = vxor.u32 %v1984, 2147483648
        %v2032 = vxor.u32 %v1986, 2147483648
        %v2033 = vmul.f32 %v2031, 1.442695
        %v2034 = vpow.pop %v2033
        %v2035 = vmul.f32 %v2032, 1.442695
        %v2036 = vpow.pop %v2035
        %v2037 = vadd.f32 %v2034, 1.0
        %v2038 = vadd.f32 %v2036, 1.0
        %v2039 = vrcp.pop %v2037
        %v2040 = vmul.f32 1.0, %v2039
        %v2041 = vrcp.pop %v2038
        %v2042 = vmul.f32 1.0, %v2041
        %v2043 = vmul.f32 %v1984, %v2040
        %v2044 = vmul.f32 %v1986, %v2042
        %v2045 = vmul.f32 %v2043, %v2025
        %v2046 = vmul.f32 %v2044, %v2027
        %v2047 = vpack.c.bf16 %v2045, %v2045
        %v2048 = vpack.c.bf16 %v2046, %v2046
        %v2049 = vld [vmem:[%s501] sm:$0xf]
        %v2050 = vld [vmem:[%s501 + $0x4] sm:$0xf]
        %v2051 = vld [vmem:[%s501 + $0x8] sm:$0xf]
        %v2052 = vld [vmem:[%s501 + $0xc] sm:$0xf]
        %v2053 = vld [vmem:[%s501 + $0x10] sm:$0xf]
        %v2054 = vld [vmem:[%s501 + $0x14] sm:$0xf]
        %v2055 = vld [vmem:[%s501 + $0x18] sm:$0xf]
        %v2056 = vld [vmem:[%s501 + $0x1c] sm:$0xf]
        %v2057 = vld [vmem:[%s501 + $0x20] sm:$0xf]
        %v2058 = vld [vmem:[%s501 + $0x24] sm:$0xf]
        %v2059 = vld [vmem:[%s501 + $0x28] sm:$0xf]
        %v2060 = vld [vmem:[%s501 + $0x2c] sm:$0xf]
        %v2061 = vld [vmem:[%s501 + $0x30] sm:$0xf]
        %v2062 = vld [vmem:[%s501 + $0x34] sm:$0xf]
        %v2063 = vld [vmem:[%s501 + $0x38] sm:$0xf]
        %v2064 = vld [vmem:[%s501 + $0x3c] sm:$0xf]
        %v2065 = vld [vmem:[%s501 + $0x40] sm:$0xf]
        %v2066 = vld [vmem:[%s501 + $0x44] sm:$0xf]
        %v2067 = vld [vmem:[%s501 + $0x48] sm:$0xf]
        %v2068 = vld [vmem:[%s501 + $0x4c] sm:$0xf]
        %v2069 = vld [vmem:[%s501 + $0x50] sm:$0xf]
        %v2070 = vld [vmem:[%s501 + $0x54] sm:$0xf]
        %v2071 = vld [vmem:[%s501 + $0x58] sm:$0xf]
        %v2072 = vld [vmem:[%s501 + $0x5c] sm:$0xf]
        %v2073 = vld [vmem:[%s501 + $0x60] sm:$0xf]
        %v2074 = vld [vmem:[%s501 + $0x64] sm:$0xf]
        %v2075 = vld [vmem:[%s501 + $0x68] sm:$0xf]
        %v2076 = vld [vmem:[%s501 + $0x6c] sm:$0xf]
        %v2077 = vld [vmem:[%s501 + $0x70] sm:$0xf]
        %v2078 = vld [vmem:[%s501 + $0x74] sm:$0xf]
        %v2079 = vld [vmem:[%s501 + $0x78] sm:$0xf]
        %v2080 = vld [vmem:[%s501 + $0x7c] sm:$0xf]
        %v2113 = vunpack.c.l.b16 %v2049
        %v2114 = vunpack.c.l.b16 %v2050
        %v2115 = vunpack.c.l.b16 %v2051
        %v2116 = vunpack.c.l.b16 %v2052
        %v2117 = vunpack.c.l.b16 %v2053
        %v2118 = vunpack.c.l.b16 %v2054
        %v2119 = vunpack.c.l.b16 %v2055
        %v2120 = vunpack.c.l.b16 %v2056
        %v2121 = vunpack.c.l.b16 %v2057
        %v2122 = vunpack.c.l.b16 %v2058
        %v2123 = vunpack.c.l.b16 %v2059
        %v2124 = vunpack.c.l.b16 %v2060
        %v2125 = vunpack.c.l.b16 %v2061
        %v2126 = vunpack.c.l.b16 %v2062
        %v2127 = vunpack.c.l.b16 %v2063
        %v2128 = vunpack.c.l.b16 %v2064
        %v2129 = vunpack.c.l.b16 %v2065
        %v2130 = vunpack.c.l.b16 %v2066
        %v2131 = vunpack.c.l.b16 %v2067
        %v2132 = vunpack.c.l.b16 %v2068
        %v2133 = vunpack.c.l.b16 %v2069
        %v2134 = vunpack.c.l.b16 %v2070
        %v2135 = vunpack.c.l.b16 %v2071
        %v2136 = vunpack.c.l.b16 %v2072
        %v2137 = vunpack.c.l.b16 %v2073
        %v2138 = vunpack.c.l.b16 %v2074
        %v2139 = vunpack.c.l.b16 %v2075
        %v2140 = vunpack.c.l.b16 %v2076
        %v2141 = vunpack.c.l.b16 %v2077
        %v2142 = vunpack.c.l.b16 %v2078
        %v2143 = vunpack.c.l.b16 %v2079
        %v2144 = vunpack.c.l.b16 %v2080
        %v2145 = vpack.c.b16 %v2114, %v2113
        %v2146 = vpack.c.b16 %v2116, %v2115
        %v2147 = vpack.c.b16 %v2118, %v2117
        %v2148 = vpack.c.b16 %v2120, %v2119
        %v2149 = vpack.c.b16 %v2122, %v2121
        %v2150 = vpack.c.b16 %v2124, %v2123
        %v2151 = vpack.c.b16 %v2126, %v2125
        %v2152 = vpack.c.b16 %v2128, %v2127
        %v2153 = vpack.c.b16 %v2130, %v2129
        %v2154 = vpack.c.b16 %v2132, %v2131
        %v2155 = vpack.c.b16 %v2134, %v2133
        %v2156 = vpack.c.b16 %v2136, %v2135
        %v2157 = vpack.c.b16 %v2138, %v2137
        %v2158 = vpack.c.b16 %v2140, %v2139
        %v2159 = vpack.c.b16 %v2142, %v2141
        %v2160 = vpack.c.b16 %v2144, %v2143
        %2177 = vmatprep.subr.bf16.mxu0 0
        %2178 = vmatpush1.bf16.msra.mxu0 %v2152
        %2179 = vmatprep.subr.bf16.mxu0 0
        %2180 = vmatpush1.bf16.msra.mxu0 %v2151
        %2181 = vmatprep.subr.bf16.mxu0 0
        %2182 = vmatpush1.bf16.msra.mxu0 %v2150
        %2183 = vmatprep.subr.bf16.mxu0 0
        %2184 = vmatpush1.bf16.msra.mxu0 %v2149
        %2185 = vmatprep.subr.bf16.mxu0 0
        %2186 = vmatpush1.bf16.msra.mxu0 %v2148
        %2187 = vmatprep.subr.bf16.mxu0 0
        %2188 = vmatpush1.bf16.msra.mxu0 %v2147
        %2189 = vmatprep.subr.bf16.mxu0 0
        %2190 = vmatpush1.bf16.msra.mxu0 %v2146
        %2191 = vmatprep.subr.bf16.mxu0 0
        %2192 = vmatpush1.bf16.msra.mxu0 %v2145
        %2193 = vmatprep.subr.bf16.mxu0 0
        %2194 = vmatpush2.bf16.msra.mxu0 %v2160
        %2195 = vmatprep.subr.bf16.mxu0 0
        %2196 = vmatpush2.bf16.msra.mxu0 %v2159
        %2197 = vmatprep.subr.bf16.mxu0 0
        %2198 = vmatpush2.bf16.msra.mxu0 %v2158
        %2199 = vmatprep.subr.bf16.mxu0 0
        %2200 = vmatpush2.bf16.msra.mxu0 %v2157
        %2201 = vmatprep.subr.bf16.mxu0 0
        %2202 = vmatpush2.bf16.msra.mxu0 %v2156
        %2203 = vmatprep.subr.bf16.mxu0 0
        %2204 = vmatpush2.bf16.msra.mxu0 %v2155
        %2205 = vmatprep.subr.bf16.mxu0 0
        %2206 = vmatpush2.bf16.msra.mxu0 %v2154
        %2207 = vmatprep.subr.bf16.mxu0 0
        %2208 = vmatpush2.bf16.msra.mxu0 %v2153
        %2209 = vmatprep.mubr.bf16.mxu0 %v2048
        %2210 = vmatmul.mubr.bf16.gmra.mxu0 %v2047
        %v2211 = vpop.f32.mrf.mxu0
        %v2212 = vadd.f32 0.0, %v2211
        %v2213 = vpop.f32.mrf.mxu0
        %v2214 = vpop.f32.mrf.mxu0
        %v2215 = vpop.f32.mrf.mxu0
        %2216 = vdwg.mxu0
        %v2217 = vadd.f32 %v1740, %v2212
        %2218 = vst [vmem:[%s471] sm:$0xff] %v2217
        %p2219 = scmp.eq.s32.totalorder %s30, 1
        // Predicated region
        $region69: #{phi3_forward.1} parent=63 // pred_check
          %p2220 = pneg %p2219
        $region70: #{phi3_forward.1} parent=63 // pred_check_branch
          %2222 = sbr.rel (%p2220) target = $region72
        $region71: #{phi3_forward.1} parent=63 // pred_region
          %v2223 = vld [vmem:[%s10] sm:$0x1]
          %v2224 = vmul.f32 %v2217, %v2217
          %2225 = vadd.xlane.f32.xlu0 %v2224
          %v2226 = vpop.xlane.xlu0 %2225
          %v2227 = vmul.f32 %v2226, %v550
          %v2228 = vadd.f32 %v2227, 1e-05
          %v2229 = vrsqrt.pop %v2228
          %v2230 = vmul.f32 %v2217, %v2229
          %v2232 = vlaneseq
          %v2233 = vshrl.u32 %v2232, 7
          %v2234 = vsub.s32 0, %v2233
          %v2235 = vrot.slane %v2223, %v2234
          %v2237 = vmul.f32 %v2230, %v2235
          %2238 = vst [vmem:[%s471] sm:$0xff] %v2237
        $region72: #{phi3_forward.1} parent=63 // pred_fallthru
          _
        %s2239 = sand.u32 %s311, 1
        %s2240 = scalar_lea.sflag [#allocation4], %s2239
        %s2241 = sand.u32 %s311, 1
        %s2242 = smul.addr %s2241, 8
        %s2243 = scalar_lea.vmem [#allocation3], %s2242
        // Predicated region
        $region73: #{phi3_forward.1} parent=63 // pred_check
          %p2244 = pneg %p321
        $region74: #{phi3_forward.1} parent=63 // pred_check_branch
          %2246 = sbr.rel (%p2244) target = $region76
        $region75: #{phi3_forward.1} parent=63 // pred_region
          %s2248 = ssub.s32 128, 128
          %2249 = vsyncadd %s2240, %s2248
          %s2250 = smul.addr %s29, 128
          %s2251 = scalar_lea.hbm %s11, %s2250
          %s2253 = sshll.u32 %s2243, 4
          %s2254 = int_to_ptr.vmem [resolvable:$true] %s2253
          %2256 = dma.vmem_to_hbm [thread:$0]  %s2254, 128, %s2251, %s2240
        $region76: #{phi3_forward.1} parent=63 // pred_fallthru
          _
      $region64: #{phi3_forward.1} parent=5 // pred_fallthru
        _
      %p2257 = scmp.le.s32.totalorder 2, %s20
      // Predicated region
      $region77: #{phi3_forward.1} parent=5 // pred_check
        %p2258 = pneg %p2257
      $region78: #{phi3_forward.1} parent=5 // pred_check_branch
        %2260 = sbr.rel (%p2258) target = $region80
      $region79: #{phi3_forward.1} parent=5 // pred_region
        %s2261 = ssub.s32 %s20, 2
        // Predicated region
        $region81: #{phi3_forward.1} parent=79 // pred_check
          %p2262 = pneg %p327
        $region82: #{phi3_forward.1} parent=79 // pred_check_branch
          %2264 = sbr.rel (%p2262) target = $region84
        $region83: #{phi3_forward.1} parent=79 // pred_region
          %s2265 = sand.u32 %s312, 1
          %s2266 = scalar_lea.sflag [#allocation4], %s2265
          %s2267 = sand.u32 %s312, 1
          %s2268 = smul.addr %s2267, 8
          %s2269 = scalar_lea.vmem [#allocation3], %s2268
          %2270 = dma.done %s2266, 128
        $region84: #{phi3_forward.1} parent=79 // pred_fallthru
          _
      $region80: #{phi3_forward.1} parent=5 // pred_fallthru
        _
    $region6: #{phi3_forward.1} parent=1 // loop_footer
      %s24 = sadd.s32 1, %s20
    $region7: #{phi3_forward.1} parent=1 // loop_footer_branch
      %19 = sbr.rel target = $region3
    $region8: #{phi3_forward.1} parent=1 // loop_exit
      _
    %2271 = vsyncpa [#allocation4], 1
    %s2272 = scalar_lea.sflag [#allocation4], 1
    %2273 = vsyncpa %s2272, 1

</llo_original>
